<compile_context>
chip_gen: v7x
topology: tpu7x:2x2x1
jax: 0.10.0
libtpu: 0.0.40
codegen_flags: <defaults>
</compile_context>

<pallas_src>
import functools

import numpy as np
import jax
import jax.numpy as jnp
from jax import lax
from jax.experimental import pallas as pl
from jax.experimental.pallas import tpu as pltpu

_LN_EPS = 1e-5  # torch.nn.LayerNorm default eps


def _mlp_kernel(num_layers, pack, matmul_dtype, x_ref, *refs):
    """Fused MLP over one row tile.

    refs layout: w_0..w_{L-1}, b_0..b_{L-1}, gamma_0..gamma_{L-2},
                 beta_0..beta_{L-2}, out_ref
    """
    L = num_layers
    w_refs = refs[0:L]
    b_refs = refs[L:2 * L]
    g_refs = refs[2 * L:3 * L - 1]
    s_refs = refs[3 * L - 1:4 * L - 2]
    out_ref = refs[-1]

    h = x_ref[...].astype(jnp.float32)                       # (TM, d_in)
    for i in range(L):
        if matmul_dtype is not None:
            a = h.astype(matmul_dtype)
            w = w_refs[i][...].astype(matmul_dtype)
        else:
            a = h
            w = w_refs[i][...]                               # native dtype feed
        h = jnp.dot(a, w, preferred_element_type=jnp.float32) \
            + b_refs[i][...].astype(jnp.float32)             # (TM, d_{i+1}) f32

        if i < L - 1:
            # LayerNorm over the feature (lane) axis, f32.
            # var = E[x^2] - mu^2: the two lane reductions are independent.
            d = h.shape[-1]
            inv_d = jnp.float32(1.0 / d)
            s1 = jnp.sum(h, axis=-1, keepdims=True)
            s2 = jnp.sum(h * h, axis=-1, keepdims=True)
            mu = s1 * inv_d
            var = s2 * inv_d - mu * mu
            h = (h - mu) * lax.rsqrt(var + _LN_EPS)
            h = h * g_refs[i][...].astype(jnp.float32) \
                  + s_refs[i][...].astype(jnp.float32)
            # SiLU: x * sigmoid(x)  (sigmoid on the EUP slot).
            h = h * jax.nn.sigmoid(h)
            # Dropout: identity in eval mode.
            # TODO(synk): training-mode dropout would need pltpu.prng_seed +
            # pltpu.stateful_bernoulli; omitted to keep the forward deterministic.

    if pack > 1:
        # Lane-dense store: pack `pack` contiguous row-chunks side-by-side so
        # the output row is a full 128 lanes (unmasked vst instead of vst.msk).
        rows = h.shape[0] // pack
        h = jnp.concatenate(
            [h[c * rows:(c + 1) * rows, :] for c in range(pack)], axis=-1)
    out_ref[...] = h.astype(out_ref.dtype)


def mlp_forward(x, weights, biases, gammas, betas, *,
                block_rows=512, matmul_dtype=None):
    """Runs the fused MLP Pallas kernel. x: (N, d_in)."""
    n, d_in = x.shape
    L = len(weights)
    d_out = weights[-1].shape[1]

    # Row tile: large tiles amortize per-step overhead; if one tile would cover
    # everything, split into 2 grid steps so v7x's two TensorCores can both run
    # (the "parallel" axis shards the grid; extra step cost on v5e/v6e ~0.35us).
    tm = min(block_rows, n)
    if tm == n and n % 2 == 0 and (n // 2) % 8 == 0:
        tm = n // 2
    assert n % tm == 0 and tm % 8 == 0, "row count must tile evenly (8-aligned)"

    # Output lane packing factor (only when it stays 8-sublane aligned).
    pack = 1
    if d_out < 128 and 128 % d_out == 0:
        p = 128 // d_out
        if tm % (8 * p) == 0:
            pack = p

    in_specs = [pl.BlockSpec((tm, d_in), lambda i: (i, 0))]
    # Parameters: full-array blocks, constant index_map -> resident in VMEM.
    for prm in list(weights) + list(biases) + list(gammas) + list(betas):
        in_specs.append(pl.BlockSpec(prm.shape, lambda i: (0, 0)))

    if pack > 1:
        out_shape = jax.ShapeDtypeStruct((n // pack, d_out * pack), x.dtype)
        out_spec = pl.BlockSpec((tm // pack, d_out * pack), lambda i: (i, 0))
    else:
        out_shape = jax.ShapeDtypeStruct((n, d_out), x.dtype)
        out_spec = pl.BlockSpec((tm, d_out), lambda i: (i, 0))

    kernel = functools.partial(_mlp_kernel, L, pack, matmul_dtype)
    out = pl.pallas_call(
        kernel,
        out_shape=out_shape,
        grid=(n // tm,),
        in_specs=in_specs,
        out_specs=out_spec,
        compiler_params=pltpu.CompilerParams(
            dimension_semantics=("parallel",),
        ),
    )(x, *weights, *biases, *gammas, *betas)

    if pack > 1:
        nb = n // tm
        out = (out.reshape(nb, tm // pack, pack, d_out)
                  .transpose(0, 2, 1, 3)
                  .reshape(n, d_out))
    return out


def mlp_reference(x, weights, biases, gammas, betas):
    """Pure-JAX reference with standard LayerNorm math (eval-mode forward)."""
    h = x.astype(jnp.float32)
    L = len(weights)
    for i in range(L):
        h = h @ weights[i].astype(jnp.float32) + biases[i].astype(jnp.float32)
        if i < L - 1:
            mu = jnp.mean(h, axis=-1, keepdims=True)
            var = jnp.mean((h - mu) ** 2, axis=-1, keepdims=True)
            h = (h - mu) / jnp.sqrt(var + _LN_EPS)
            h = h * gammas[i] + betas[i]
            h = h * (1.0 / (1.0 + jnp.exp(-h)))
    return h.astype(x.dtype)


def _xavier_uniform(key, fan_in, fan_out, dtype=jnp.float32):
    bound = float(np.sqrt(6.0 / (fan_in + fan_out)))
    return jax.random.uniform(key, (fan_in, fan_out), dtype,
                              minval=-bound, maxval=bound)


if __name__ == "__main__":
    key = jax.random.PRNGKey(0)

    # Module config: MLP(input_dim=32, hidden_dims=[128, 128], output_dim=64)
    input_dim = 32
    hidden_dims = [128, 128]
    output_dim = 64
    dims = [input_dim] + hidden_dims + [output_dim]
    L = len(dims) - 1

    N = 256  # total rows (e.g. batch * nodes)

    keys = jax.random.split(key, L + 1)
    x = jax.random.normal(keys[0], (N, input_dim), dtype=jnp.float32)

    weights, biases, gammas, betas = [], [], [], []
    for i in range(L):
        weights.append(_xavier_uniform(keys[i + 1], dims[i], dims[i + 1]))
        biases.append(jnp.zeros((1, dims[i + 1]), jnp.float32))
        if i + 1 < L:  # LayerNorm params only for hidden layers
            gammas.append(jnp.ones((1, dims[i + 1]), jnp.float32))
            betas.append(jnp.zeros((1, dims[i + 1]), jnp.float32))

    out = jax.block_until_ready(
        mlp_forward(x, weights, biases, gammas, betas, block_rows=512))
    ref = jax.block_until_ready(
        mlp_reference(x, weights, biases, gammas, betas))

    assert out.shape == (N, output_dim)
    max_err = float(np.max(np.abs(np.asarray(out) - np.asarray(ref))))
    assert np.allclose(np.asarray(out), np.asarray(ref),
                       atol=5e-4, rtol=5e-4), max_err

    print("KERNEL_OK")
</pallas_src>

<mosaic_0001>
module attributes {stable_mosaic.version = 11 : i64} {
  func.func @_mlp_kernel(%arg0: i32, %arg1: memref<128x32xf32, #tpu.memory_space<vmem>>, %arg2: memref<32x128xf32, #tpu.memory_space<vmem>>, %arg3: memref<128x128xf32, #tpu.memory_space<vmem>>, %arg4: memref<128x64xf32, #tpu.memory_space<vmem>>, %arg5: memref<1x128xf32, #tpu.memory_space<vmem>>, %arg6: memref<1x128xf32, #tpu.memory_space<vmem>>, %arg7: memref<1x64xf32, #tpu.memory_space<vmem>>, %arg8: memref<1x128xf32, #tpu.memory_space<vmem>>, %arg9: memref<1x128xf32, #tpu.memory_space<vmem>>, %arg10: memref<1x128xf32, #tpu.memory_space<vmem>>, %arg11: memref<1x128xf32, #tpu.memory_space<vmem>>, %arg12: memref<64x128xf32, #tpu.memory_space<vmem>>) attributes {dimension_semantics = [#tpu.dimension_semantics<parallel>], iteration_bounds = array<i64: 2>, scalar_prefetch = 0 : i64, scratch_operands = 0 : i64, tpu.core_type = #tpu.core_type<tc>, window_params = [{transform_indices = @transform_0, window_bounds = array<i64: 128, 32>}, {pipeline_mode = #tpu.pipeline_mode<synchronous>, transform_indices = @transform_1, window_bounds = array<i64: 32, 128>}, {pipeline_mode = #tpu.pipeline_mode<synchronous>, transform_indices = @transform_2, window_bounds = array<i64: 128, 128>}, {pipeline_mode = #tpu.pipeline_mode<synchronous>, transform_indices = @transform_3, window_bounds = array<i64: 128, 64>}, {pipeline_mode = #tpu.pipeline_mode<synchronous>, transform_indices = @transform_4, window_bounds = array<i64: 1, 128>}, {pipeline_mode = #tpu.pipeline_mode<synchronous>, transform_indices = @transform_5, window_bounds = array<i64: 1, 128>}, {pipeline_mode = #tpu.pipeline_mode<synchronous>, transform_indices = @transform_6, window_bounds = array<i64: 1, 64>}, {pipeline_mode = #tpu.pipeline_mode<synchronous>, transform_indices = @transform_7, window_bounds = array<i64: 1, 128>}, {pipeline_mode = #tpu.pipeline_mode<synchronous>, transform_indices = @transform_8, window_bounds = array<i64: 1, 128>}, {pipeline_mode = #tpu.pipeline_mode<synchronous>, transform_indices = @transform_9, window_bounds = array<i64: 1, 128>}, {pipeline_mode = #tpu.pipeline_mode<synchronous>, transform_indices = @transform_10, window_bounds = array<i64: 1, 128>}, {transform_indices = @transform_11, window_bounds = array<i64: 64, 128>}]} {
    %c0 = arith.constant 0 : index
    %c0_0 = arith.constant 0 : index
    %0 = vector.load %arg1[%c0, %c0_0] : memref<128x32xf32, #tpu.memory_space<vmem>>, vector<128x32xf32>
    %c0_1 = arith.constant 0 : index
    %c0_2 = arith.constant 0 : index
    %1 = vector.load %arg2[%c0_1, %c0_2] : memref<32x128xf32, #tpu.memory_space<vmem>>, vector<32x128xf32>
    %cst = arith.constant dense<0.000000e+00> : vector<128x128xf32>
    %2 = tpu.matmul %0, %1, %cst {dimension_numbers = #tpu.dot_dimension_numbers<[1], [0], [0], [1], [0, 0, 1, 1], [], []>} : vector<128x32xf32>, vector<32x128xf32>, vector<128x128xf32> -> vector<128x128xf32>
    %c0_3 = arith.constant 0 : index
    %c0_4 = arith.constant 0 : index
    %3 = vector.load %arg5[%c0_3, %c0_4] : memref<1x128xf32, #tpu.memory_space<vmem>>, vector<1x128xf32>
    %4 = vector.broadcast %3 : vector<1x128xf32> to vector<128x128xf32>
    %5 = arith.addf %2, %4 : vector<128x128xf32>
    %cst_5 = arith.constant dense<0.000000e+00> : vector<128xf32>
    %6 = vector.multi_reduction <add>, %5, %cst_5 [1] : vector<128x128xf32> to vector<128xf32>
    %7 = vector.shape_cast %6 : vector<128xf32> to vector<128x1xf32>
    %8 = arith.mulf %5, %5 : vector<128x128xf32>
    %cst_6 = arith.constant dense<0.000000e+00> : vector<128xf32>
    %9 = vector.multi_reduction <add>, %8, %cst_6 [1] : vector<128x128xf32> to vector<128xf32>
    %10 = vector.shape_cast %9 : vector<128xf32> to vector<128x1xf32>
    %cst_7 = arith.constant 7.812500e-03 : f32
    %11 = vector.broadcast %cst_7 : f32 to vector<128x1xf32>
    %12 = arith.mulf %7, %11 : vector<128x1xf32>
    %cst_8 = arith.constant 7.812500e-03 : f32
    %13 = vector.broadcast %cst_8 : f32 to vector<128x1xf32>
    %14 = arith.mulf %10, %13 : vector<128x1xf32>
    %15 = arith.mulf %12, %12 : vector<128x1xf32>
    %16 = arith.subf %14, %15 : vector<128x1xf32>
    %17 = vector.broadcast %12 : vector<128x1xf32> to vector<128x128xf32>
    %18 = arith.subf %5, %17 : vector<128x128xf32>
    %cst_9 = arith.constant 9.99999974E-6 : f32
    %19 = vector.broadcast %cst_9 : f32 to vector<128x1xf32>
    %20 = arith.addf %16, %19 : vector<128x1xf32>
    %21 = math.rsqrt %20 : vector<128x1xf32>
    %22 = vector.broadcast %21 : vector<128x1xf32> to vector<128x128xf32>
    %23 = arith.mulf %18, %22 : vector<128x128xf32>
    %c0_10 = arith.constant 0 : index
    %c0_11 = arith.constant 0 : index
    %24 = vector.load %arg8[%c0_10, %c0_11] : memref<1x128xf32, #tpu.memory_space<vmem>>, vector<1x128xf32>
    %25 = vector.broadcast %24 : vector<1x128xf32> to vector<128x128xf32>
    %26 = arith.mulf %23, %25 : vector<128x128xf32>
    %c0_12 = arith.constant 0 : index
    %c0_13 = arith.constant 0 : index
    %27 = vector.load %arg10[%c0_12, %c0_13] : memref<1x128xf32, #tpu.memory_space<vmem>>, vector<1x128xf32>
    %28 = vector.broadcast %27 : vector<1x128xf32> to vector<128x128xf32>
    %29 = arith.addf %26, %28 : vector<128x128xf32>
    %30 = arith.negf %29 : vector<128x128xf32>
    %31 = math.exp %30 : vector<128x128xf32>
    %cst_14 = arith.constant 1.000000e+00 : f32
    %32 = vector.broadcast %cst_14 : f32 to vector<128x128xf32>
    %33 = arith.addf %32, %31 : vector<128x128xf32>
    %34 = arith.divf %32, %33 : vector<128x128xf32>
    %35 = arith.mulf %29, %34 : vector<128x128xf32>
    %c0_15 = arith.constant 0 : index
    %c0_16 = arith.constant 0 : index
    %36 = vector.load %arg3[%c0_15, %c0_16] : memref<128x128xf32, #tpu.memory_space<vmem>>, vector<128x128xf32>
    %cst_17 = arith.constant dense<0.000000e+00> : vector<128x128xf32>
    %37 = tpu.matmul %35, %36, %cst_17 {dimension_numbers = #tpu.dot_dimension_numbers<[1], [0], [0], [1], [0, 0, 1, 1], [], []>} : vector<128x128xf32>, vector<128x128xf32>, vector<128x128xf32> -> vector<128x128xf32>
    %c0_18 = arith.constant 0 : index
    %c0_19 = arith.constant 0 : index
    %38 = vector.load %arg6[%c0_18, %c0_19] : memref<1x128xf32, #tpu.memory_space<vmem>>, vector<1x128xf32>
    %39 = vector.broadcast %38 : vector<1x128xf32> to vector<128x128xf32>
    %40 = arith.addf %37, %39 : vector<128x128xf32>
    %cst_20 = arith.constant dense<0.000000e+00> : vector<128xf32>
    %41 = vector.multi_reduction <add>, %40, %cst_20 [1] : vector<128x128xf32> to vector<128xf32>
    %42 = vector.shape_cast %41 : vector<128xf32> to vector<128x1xf32>
    %43 = arith.mulf %40, %40 : vector<128x128xf32>
    %cst_21 = arith.constant dense<0.000000e+00> : vector<128xf32>
    %44 = vector.multi_reduction <add>, %43, %cst_21 [1] : vector<128x128xf32> to vector<128xf32>
    %45 = vector.shape_cast %44 : vector<128xf32> to vector<128x1xf32>
    %cst_22 = arith.constant 7.812500e-03 : f32
    %46 = vector.broadcast %cst_22 : f32 to vector<128x1xf32>
    %47 = arith.mulf %42, %46 : vector<128x1xf32>
    %cst_23 = arith.constant 7.812500e-03 : f32
    %48 = vector.broadcast %cst_23 : f32 to vector<128x1xf32>
    %49 = arith.mulf %45, %48 : vector<128x1xf32>
    %50 = arith.mulf %47, %47 : vector<128x1xf32>
    %51 = arith.subf %49, %50 : vector<128x1xf32>
    %52 = vector.broadcast %47 : vector<128x1xf32> to vector<128x128xf32>
    %53 = arith.subf %40, %52 : vector<128x128xf32>
    %cst_24 = arith.constant 9.99999974E-6 : f32
    %54 = vector.broadcast %cst_24 : f32 to vector<128x1xf32>
    %55 = arith.addf %51, %54 : vector<128x1xf32>
    %56 = math.rsqrt %55 : vector<128x1xf32>
    %57 = vector.broadcast %56 : vector<128x1xf32> to vector<128x128xf32>
    %58 = arith.mulf %53, %57 : vector<128x128xf32>
    %c0_25 = arith.constant 0 : index
    %c0_26 = arith.constant 0 : index
    %59 = vector.load %arg9[%c0_25, %c0_26] : memref<1x128xf32, #tpu.memory_space<vmem>>, vector<1x128xf32>
    %60 = vector.broadcast %59 : vector<1x128xf32> to vector<128x128xf32>
    %61 = arith.mulf %58, %60 : vector<128x128xf32>
    %c0_27 = arith.constant 0 : index
    %c0_28 = arith.constant 0 : index
    %62 = vector.load %arg11[%c0_27, %c0_28] : memref<1x128xf32, #tpu.memory_space<vmem>>, vector<1x128xf32>
    %63 = vector.broadcast %62 : vector<1x128xf32> to vector<128x128xf32>
    %64 = arith.addf %61, %63 : vector<128x128xf32>
    %65 = arith.negf %64 : vector<128x128xf32>
    %66 = math.exp %65 : vector<128x128xf32>
    %cst_29 = arith.constant 1.000000e+00 : f32
    %67 = vector.broadcast %cst_29 : f32 to vector<128x128xf32>
    %68 = arith.addf %67, %66 : vector<128x128xf32>
    %69 = arith.divf %67, %68 : vector<128x128xf32>
    %70 = arith.mulf %64, %69 : vector<128x128xf32>
    %c0_30 = arith.constant 0 : index
    %c0_31 = arith.constant 0 : index
    %71 = vector.load %arg4[%c0_30, %c0_31] : memref<128x64xf32, #tpu.memory_space<vmem>>, vector<128x64xf32>
    %cst_32 = arith.constant dense<0.000000e+00> : vector<128x64xf32>
    %72 = tpu.matmul %70, %71, %cst_32 {dimension_numbers = #tpu.dot_dimension_numbers<[1], [0], [0], [1], [0, 0, 1, 1], [], []>} : vector<128x128xf32>, vector<128x64xf32>, vector<128x64xf32> -> vector<128x64xf32>
    %c0_33 = arith.constant 0 : index
    %c0_34 = arith.constant 0 : index
    %73 = vector.load %arg7[%c0_33, %c0_34] : memref<1x64xf32, #tpu.memory_space<vmem>>, vector<1x64xf32>
    %74 = vector.broadcast %73 : vector<1x64xf32> to vector<128x64xf32>
    %75 = arith.addf %72, %74 : vector<128x64xf32>
    %76 = vector.extract_strided_slice %75 {offsets = [0, 0], sizes = [64, 64], strides = [1, 1]} : vector<128x64xf32> to vector<64x64xf32>
    %77 = vector.extract_strided_slice %75 {offsets = [64, 0], sizes = [64, 64], strides = [1, 1]} : vector<128x64xf32> to vector<64x64xf32>
    %78 = tpu.concatenate %76, %77 in 1 : vector<64x64xf32>, vector<64x64xf32> -> vector<64x128xf32>
    %c0_35 = arith.constant 0 : index
    %c0_36 = arith.constant 0 : index
    %79 = vector.load %arg12[%c0_35, %c0_36] : memref<64x128xf32, #tpu.memory_space<vmem>>, vector<64x128xf32>
    tpu.vector_store %arg12[%c0_35, %c0_36], %78 {strides = array<i32>} : memref<64x128xf32, #tpu.memory_space<vmem>>, vector<64x128xf32>,
    return
  }
  func.func @transform_0(%arg0: i32) -> (i32, i32) {
    %c0_i32 = arith.constant 0 : i32
    %c0_i32_0 = arith.constant 0 : i32
    return %arg0, %c0_i32 : i32, i32
  }
  func.func @transform_1(%arg0: i32) -> (i32, i32) {
    %c0_i32 = arith.constant 0 : i32
    %c0_i32_0 = arith.constant 0 : i32
    %c0_i32_1 = arith.constant 0 : i32
    return %c0_i32, %c0_i32_0 : i32, i32
  }
  func.func @transform_2(%arg0: i32) -> (i32, i32) {
    %c0_i32 = arith.constant 0 : i32
    %c0_i32_0 = arith.constant 0 : i32
    %c0_i32_1 = arith.constant 0 : i32
    return %c0_i32, %c0_i32_0 : i32, i32
  }
  func.func @transform_3(%arg0: i32) -> (i32, i32) {
    %c0_i32 = arith.constant 0 : i32
    %c0_i32_0 = arith.constant 0 : i32
    %c0_i32_1 = arith.constant 0 : i32
    return %c0_i32, %c0_i32_0 : i32, i32
  }
  func.func @transform_4(%arg0: i32) -> (i32, i32) {
    %c0_i32 = arith.constant 0 : i32
    %c0_i32_0 = arith.constant 0 : i32
    %c0_i32_1 = arith.constant 0 : i32
    return %c0_i32, %c0_i32_0 : i32, i32
  }
  func.func @transform_5(%arg0: i32) -> (i32, i32) {
    %c0_i32 = arith.constant 0 : i32
    %c0_i32_0 = arith.constant 0 : i32
    %c0_i32_1 = arith.constant 0 : i32
    return %c0_i32, %c0_i32_0 : i32, i32
  }
  func.func @transform_6(%arg0: i32) -> (i32, i32) {
    %c0_i32 = arith.constant 0 : i32
    %c0_i32_0 = arith.constant 0 : i32
    %c0_i32_1 = arith.constant 0 : i32
    return %c0_i32, %c0_i32_0 : i32, i32
  }
  func.func @transform_7(%arg0: i32) -> (i32, i32) {
    %c0_i32 = arith.constant 0 : i32
    %c0_i32_0 = arith.constant 0 : i32
    %c0_i32_1 = arith.constant 0 : i32
    return %c0_i32, %c0_i32_0 : i32, i32
  }
  func.func @transform_8(%arg0: i32) -> (i32, i32) {
    %c0_i32 = arith.constant 0 : i32
    %c0_i32_0 = arith.constant 0 : i32
    %c0_i32_1 = arith.constant 0 : i32
    return %c0_i32, %c0_i32_0 : i32, i32
  }
  func.func @transform_9(%arg0: i32) -> (i32, i32) {
    %c0_i32 = arith.constant 0 : i32
    %c0_i32_0 = arith.constant 0 : i32
    %c0_i32_1 = arith.constant 0 : i32
    return %c0_i32, %c0_i32_0 : i32, i32
  }
  func.func @transform_10(%arg0: i32) -> (i32, i32) {
    %c0_i32 = arith.constant 0 : i32
    %c0_i32_0 = arith.constant 0 : i32
    %c0_i32_1 = arith.constant 0 : i32
    return %c0_i32, %c0_i32_0 : i32, i32
  }
  func.func @transform_11(%arg0: i32) -> (i32, i32) {
    %c0_i32 = arith.constant 0 : i32
    %c0_i32_0 = arith.constant 0 : i32
    return %arg0, %c0_i32 : i32, i32
  }
}

</mosaic_0001>

<llo_original>
// kernel: tpu_custom_call.1
$region0: #{tpu_custom_call.1}
  #allocation0 [shape = 'u32[]', space=smem, size = 0x4, offset = 0x4, fixed_abs, tag = 'smem constant byte address 0x4 - core index']
  #allocation1 [shape = 'u32[144,128]{1,0:T(1,128)}', space=vmem, size = 0x12000, scoped, tag = 'internal scratch']
  %s0 = inlined_call_operand.vmem [shape: f32[256,32], index: 0, kind: input, shape index: {}]
  %s1 = inlined_call_operand.vmem [shape: f32[32,128], index: 1, kind: input, shape index: {}]
  %s2 = inlined_call_operand.vmem [shape: f32[128,128], index: 2, kind: input, shape index: {}]
  %s3 = inlined_call_operand.vmem [shape: f32[128,64], index: 3, kind: input, shape index: {}]
  %s4 = inlined_call_operand.vmem [shape: f32[1,128], index: 4, kind: input, shape index: {}]
  %s5 = inlined_call_operand.vmem [shape: f32[1,128], index: 5, kind: input, shape index: {}]
  %s6 = inlined_call_operand.vmem [shape: f32[1,64], index: 6, kind: input, shape index: {}]
  %s7 = inlined_call_operand.vmem [shape: f32[1,128], index: 7, kind: input, shape index: {}]
  %s8 = inlined_call_operand.vmem [shape: f32[1,128], index: 8, kind: input, shape index: {}]
  %s9 = inlined_call_operand.vmem [shape: f32[1,128], index: 9, kind: input, shape index: {}]
  %s10 = inlined_call_operand.vmem [shape: f32[1,128], index: 10, kind: input, shape index: {}]
  %s11 = inlined_call_operand.hbm [shape: f32[128,128], index: 11, kind: output, shape index: {}]
  %s12 = sld [smem:[#allocation0]]
  $region77: #{tpu_custom_call.1} parent=0
    _
  %s14 = ssub.s32 1, %s12
  %s15 = scalar_select 0, %s14, %s12
  $region1: #{tpu_custom_call.1} parent=0
    #allocation2 [shape = 'u8[65536]{0}', space=vmem, size = 0x10000, scoped, tag = 'output window, operand 0']
    #allocation3 [shape = 's32[2]{0}', space=sflag, size = 0x8, scoped, tag = 'scoped memory for tpu_custom_call.1']
    %16 = vsyncpa [#allocation3], 0
    %s17 = scalar_lea.sflag [#allocation3], 1
    %18 = vsyncpa %s17, 0
    loop: start=0, step=1, limit=4
    $region2: #{tpu_custom_call.1} parent=1 // loop_pre_header
      _
    $region3: #{tpu_custom_call.1} parent=1 // loop_header
      %s20 = sphi 0, %s24
      %p21 = scmp.ge.s32.totalorder %s20, 4
      %s30 = sphi 0, %s32
      %s33 = sphi 0, %s30
      %s34 = sphi 0, %s33
      %s50 = sphi 0, %s34
      %s54 = sphi 0, %s54
      %s56 = sphi 0, %s54
      %s57 = sphi 0, %s56
      %s71 = sphi 0, %s57
      %s75 = sphi 0, %s75
      %s77 = sphi 0, %s75
      %s78 = sphi 0, %s77
      %s92 = sphi 0, %s78
      %s96 = sphi 0, %s96
      %s98 = sphi 0, %s96
      %s99 = sphi 0, %s98
      %s113 = sphi 0, %s99
      %s117 = sphi 0, %s117
      %s119 = sphi 0, %s117
      %s120 = sphi 0, %s119
      %s134 = sphi 0, %s120
      %s138 = sphi 0, %s138
      %s140 = sphi 0, %s138
      %s141 = sphi 0, %s140
      %s155 = sphi 0, %s141
      %s159 = sphi 0, %s159
      %s161 = sphi 0, %s159
      %s162 = sphi 0, %s161
      %s176 = sphi 0, %s162
      %s180 = sphi 0, %s180
      %s182 = sphi 0, %s180
      %s183 = sphi 0, %s182
      %s197 = sphi 0, %s183
      %s201 = sphi 0, %s201
      %s203 = sphi 0, %s201
      %s204 = sphi 0, %s203
      %s218 = sphi 0, %s204
      %s222 = sphi 0, %s222
      %s224 = sphi 0, %s222
      %s225 = sphi 0, %s224
      %s239 = sphi 0, %s225
      %s243 = sphi 0, %s243
      %s245 = sphi 0, %s243
      %s246 = sphi 0, %s245
      %s260 = sphi 0, %s246
      %s266 = sphi 0, %s268
      %s269 = sphi 0, %s266
      %s270 = sphi 0, %s269
      %s286 = sphi 0, %s270
    $region4: #{tpu_custom_call.1} parent=1 // loop_header_branch
      %23 = sbr.rel (%p21) target = $region8
    $region5: #{tpu_custom_call.1} parent=1 // loop_body
      %s25 = ssub.s32 %s20, 1
      %s26 = ssub.s32 %s20, 2
      %s27 = sadd.s32 %s20, 1
      %s28 = ssub.s32 %s20, %s27
      %p29 = scmp.eq.s32.totalorder %s28, 0
      %s31 = sadd.s32 %s30, 1
      %s32 = scalar_select %p29, %s30, %s31
      %p35 = pneg %p29
      %p36 = scmp.eq.s32.totalorder %s20, 1
      %p37 = por %p35, %p36
      %p38 = scmp.ne.s32.totalorder %s30, %s33
      %p39 = scmp.eq.s32.totalorder %s20, 0
      %p40 = por %p38, %p39
      %p41 = scmp.ne.s32.totalorder %s30, %s33
      %p42 = scmp.eq.s32.totalorder %s25, 1
      %p43 = por %p41, %p42
      %p44 = scmp.ne.s32.totalorder %s33, %s34
      %p45 = scmp.eq.s32.totalorder %s25, 0
      %p46 = por %p44, %p45
      %p47 = scmp.ne.s32.totalorder %s33, %s34
      %p48 = scmp.eq.s32.totalorder %s26, 1
      %p49 = por %p47, %p48
      %p51 = scmp.ne.s32.totalorder %s34, %s50
      %p52 = scmp.eq.s32.totalorder %s26, 0
      %p53 = por %p51, %p52
      %s55 = sadd.s32 %s54, 1
      %p58 = scmp.eq.s32.totalorder %s20, 1
      %p59 = scmp.ne.s32.totalorder %s54, %s56
      %p60 = scmp.eq.s32.totalorder %s20, 0
      %p61 = por %p59, %p60
      %p62 = scmp.ne.s32.totalorder %s54, %s56
      %p63 = scmp.eq.s32.totalorder %s25, 1
      %p64 = por %p62, %p63
      %p65 = scmp.ne.s32.totalorder %s56, %s57
      %p66 = scmp.eq.s32.totalorder %s25, 0
      %p67 = por %p65, %p66
      %p68 = scmp.ne.s32.totalorder %s56, %s57
      %p69 = scmp.eq.s32.totalorder %s26, 1
      %p70 = por %p68, %p69
      %p72 = scmp.ne.s32.totalorder %s57, %s71
      %p73 = scmp.eq.s32.totalorder %s26, 0
      %p74 = por %p72, %p73
      %s76 = sadd.s32 %s75, 1
      %p79 = scmp.eq.s32.totalorder %s20, 1
      %p80 = scmp.ne.s32.totalorder %s75, %s77
      %p81 = scmp.eq.s32.totalorder %s20, 0
      %p82 = por %p80, %p81
      %p83 = scmp.ne.s32.totalorder %s75, %s77
      %p84 = scmp.eq.s32.totalorder %s25, 1
      %p85 = por %p83, %p84
      %p86 = scmp.ne.s32.totalorder %s77, %s78
      %p87 = scmp.eq.s32.totalorder %s25, 0
      %p88 = por %p86, %p87
      %p89 = scmp.ne.s32.totalorder %s77, %s78
      %p90 = scmp.eq.s32.totalorder %s26, 1
      %p91 = por %p89, %p90
      %p93 = scmp.ne.s32.totalorder %s78, %s92
      %p94 = scmp.eq.s32.totalorder %s26, 0
      %p95 = por %p93, %p94
      %s97 = sadd.s32 %s96, 1
      %p100 = scmp.eq.s32.totalorder %s20, 1
      %p101 = scmp.ne.s32.totalorder %s96, %s98
      %p102 = scmp.eq.s32.totalorder %s20, 0
      %p103 = por %p101, %p102
      %p104 = scmp.ne.s32.totalorder %s96, %s98
      %p105 = scmp.eq.s32.totalorder %s25, 1
      %p106 = por %p104, %p105
      %p107 = scmp.ne.s32.totalorder %s98, %s99
      %p108 = scmp.eq.s32.totalorder %s25, 0
      %p109 = por %p107, %p108
      %p110 = scmp.ne.s32.totalorder %s98, %s99
      %p111 = scmp.eq.s32.totalorder %s26, 1
      %p112 = por %p110, %p111
      %p114 = scmp.ne.s32.totalorder %s99, %s113
      %p115 = scmp.eq.s32.totalorder %s26, 0
      %p116 = por %p114, %p115
      %s118 = sadd.s32 %s117, 1
      %p121 = scmp.eq.s32.totalorder %s20, 1
      %p122 = scmp.ne.s32.totalorder %s117, %s119
      %p123 = scmp.eq.s32.totalorder %s20, 0
      %p124 = por %p122, %p123
      %p125 = scmp.ne.s32.totalorder %s117, %s119
      %p126 = scmp.eq.s32.totalorder %s25, 1
      %p127 = por %p125, %p126
      %p128 = scmp.ne.s32.totalorder %s119, %s120
      %p129 = scmp.eq.s32.totalorder %s25, 0
      %p130 = por %p128, %p129
      %p131 = scmp.ne.s32.totalorder %s119, %s120
      %p132 = scmp.eq.s32.totalorder %s26, 1
      %p133 = por %p131, %p132
      %p135 = scmp.ne.s32.totalorder %s120, %s134
      %p136 = scmp.eq.s32.totalorder %s26, 0
      %p137 = por %p135, %p136
      %s139 = sadd.s32 %s138, 1
      %p142 = scmp.eq.s32.totalorder %s20, 1
      %p143 = scmp.ne.s32.totalorder %s138, %s140
      %p144 = scmp.eq.s32.totalorder %s20, 0
      %p145 = por %p143, %p144
      %p146 = scmp.ne.s32.totalorder %s138, %s140
      %p147 = scmp.eq.s32.totalorder %s25, 1
      %p148 = por %p146, %p147
      %p149 = scmp.ne.s32.totalorder %s140, %s141
      %p150 = scmp.eq.s32.totalorder %s25, 0
      %p151 = por %p149, %p150
      %p152 = scmp.ne.s32.totalorder %s140, %s141
      %p153 = scmp.eq.s32.totalorder %s26, 1
      %p154 = por %p152, %p153
      %p156 = scmp.ne.s32.totalorder %s141, %s155
      %p157 = scmp.eq.s32.totalorder %s26, 0
      %p158 = por %p156, %p157
      %s160 = sadd.s32 %s159, 1
      %p163 = scmp.eq.s32.totalorder %s20, 1
      %p164 = scmp.ne.s32.totalorder %s159, %s161
      %p165 = scmp.eq.s32.totalorder %s20, 0
      %p166 = por %p164, %p165
      %p167 = scmp.ne.s32.totalorder %s159, %s161
      %p168 = scmp.eq.s32.totalorder %s25, 1
      %p169 = por %p167, %p168
      %p170 = scmp.ne.s32.totalorder %s161, %s162
      %p171 = scmp.eq.s32.totalorder %s25, 0
      %p172 = por %p170, %p171
      %p173 = scmp.ne.s32.totalorder %s161, %s162
      %p174 = scmp.eq.s32.totalorder %s26, 1
      %p175 = por %p173, %p174
      %p177 = scmp.ne.s32.totalorder %s162, %s176
      %p178 = scmp.eq.s32.totalorder %s26, 0
      %p179 = por %p177, %p178
      %s181 = sadd.s32 %s180, 1
      %p184 = scmp.eq.s32.totalorder %s20, 1
      %p185 = scmp.ne.s32.totalorder %s180, %s182
      %p186 = scmp.eq.s32.totalorder %s20, 0
      %p187 = por %p185, %p186
      %p188 = scmp.ne.s32.totalorder %s180, %s182
      %p189 = scmp.eq.s32.totalorder %s25, 1
      %p190 = por %p188, %p189
      %p191 = scmp.ne.s32.totalorder %s182, %s183
      %p192 = scmp.eq.s32.totalorder %s25, 0
      %p193 = por %p191, %p192
      %p194 = scmp.ne.s32.totalorder %s182, %s183
      %p195 = scmp.eq.s32.totalorder %s26, 1
      %p196 = por %p194, %p195
      %p198 = scmp.ne.s32.totalorder %s183, %s197
      %p199 = scmp.eq.s32.totalorder %s26, 0
      %p200 = por %p198, %p199
      %s202 = sadd.s32 %s201, 1
      %p205 = scmp.eq.s32.totalorder %s20, 1
      %p206 = scmp.ne.s32.totalorder %s201, %s203
      %p207 = scmp.eq.s32.totalorder %s20, 0
      %p208 = por %p206, %p207
      %p209 = scmp.ne.s32.totalorder %s201, %s203
      %p210 = scmp.eq.s32.totalorder %s25, 1
      %p211 = por %p209, %p210
      %p212 = scmp.ne.s32.totalorder %s203, %s204
      %p213 = scmp.eq.s32.totalorder %s25, 0
      %p214 = por %p212, %p213
      %p215 = scmp.ne.s32.totalorder %s203, %s204
      %p216 = scmp.eq.s32.totalorder %s26, 1
      %p217 = por %p215, %p216
      %p219 = scmp.ne.s32.totalorder %s204, %s218
      %p220 = scmp.eq.s32.totalorder %s26, 0
      %p221 = por %p219, %p220
      %s223 = sadd.s32 %s222, 1
      %p226 = scmp.eq.s32.totalorder %s20, 1
      %p227 = scmp.ne.s32.totalorder %s222, %s224
      %p228 = scmp.eq.s32.totalorder %s20, 0
      %p229 = por %p227, %p228
      %p230 = scmp.ne.s32.totalorder %s222, %s224
      %p231 = scmp.eq.s32.totalorder %s25, 1
      %p232 = por %p230, %p231
      %p233 = scmp.ne.s32.totalorder %s224, %s225
      %p234 = scmp.eq.s32.totalorder %s25, 0
      %p235 = por %p233, %p234
      %p236 = scmp.ne.s32.totalorder %s224, %s225
      %p237 = scmp.eq.s32.totalorder %s26, 1
      %p238 = por %p236, %p237
      %p240 = scmp.ne.s32.totalorder %s225, %s239
      %p241 = scmp.eq.s32.totalorder %s26, 0
      %p242 = por %p240, %p241
      %s244 = sadd.s32 %s243, 1
      %p247 = scmp.eq.s32.totalorder %s20, 1
      %p248 = scmp.ne.s32.totalorder %s243, %s245
      %p249 = scmp.eq.s32.totalorder %s20, 0
      %p250 = por %p248, %p249
      %p251 = scmp.ne.s32.totalorder %s243, %s245
      %p252 = scmp.eq.s32.totalorder %s25, 1
      %p253 = por %p251, %p252
      %p254 = scmp.ne.s32.totalorder %s245, %s246
      %p255 = scmp.eq.s32.totalorder %s25, 0
      %p256 = por %p254, %p255
      %p257 = scmp.ne.s32.totalorder %s245, %s246
      %p258 = scmp.eq.s32.totalorder %s26, 1
      %p259 = por %p257, %p258
      %p261 = scmp.ne.s32.totalorder %s246, %s260
      %p262 = scmp.eq.s32.totalorder %s26, 0
      %p263 = por %p261, %p262
      %s264 = ssub.s32 %s20, %s27
      %p265 = scmp.eq.s32.totalorder %s264, 0
      %s267 = sadd.s32 %s266, 1
      %s268 = scalar_select %p265, %s266, %s267
      %p271 = pneg %p265
      %p272 = scmp.eq.s32.totalorder %s20, 1
      %p273 = por %p271, %p272
      %p274 = scmp.ne.s32.totalorder %s266, %s269
      %p275 = scmp.eq.s32.totalorder %s20, 0
      %p276 = por %p274, %p275
      %p277 = scmp.ne.s32.totalorder %s266, %s269
      %p278 = scmp.eq.s32.totalorder %s25, 1
      %p279 = por %p277, %p278
      %p280 = scmp.ne.s32.totalorder %s269, %s270
      %p281 = scmp.eq.s32.totalorder %s25, 0
      %p282 = por %p280, %p281
      %p283 = scmp.ne.s32.totalorder %s269, %s270
      %p284 = scmp.eq.s32.totalorder %s26, 1
      %p285 = por %p283, %p284
      %p287 = scmp.ne.s32.totalorder %s270, %s286
      %p288 = scmp.eq.s32.totalorder %s26, 0
      %p289 = por %p287, %p288
      %p290 = scmp.le.s32.totalorder 1, %s20
      %p291 = scmp.lt.s32.totalorder %s20, 3
      %p292 = pnand %p290, %p291
      %p293 = pneg %p292
      // Predicated region
      $region9: #{tpu_custom_call.1} parent=5 // pred_check
        _
      $region10: #{tpu_custom_call.1} parent=5 // pred_check_branch
        %295 = sbr.rel (%p292) target = $region12
      $region11: #{tpu_custom_call.1} parent=5 // pred_region
        %s296 = ssub.s32 %s20, 1
        // Predicated region
        $region13: #{tpu_custom_call.1} parent=11 // pred_check
          %p297 = pneg %p67
        $region14: #{tpu_custom_call.1} parent=11 // pred_check_branch
          %299 = sbr.rel (%p297) target = $region16
        $region15: #{tpu_custom_call.1} parent=11 // pred_region
          _
        $region16: #{tpu_custom_call.1} parent=11 // pred_fallthru
          _
        // Predicated region
        $region17: #{tpu_custom_call.1} parent=11 // pred_check
          %p300 = pneg %p88
        $region18: #{tpu_custom_call.1} parent=11 // pred_check_branch
          %302 = sbr.rel (%p300) target = $region20
        $region19: #{tpu_custom_call.1} parent=11 // pred_region
          _
        $region20: #{tpu_custom_call.1} parent=11 // pred_fallthru
          _
        // Predicated region
        $region21: #{tpu_custom_call.1} parent=11 // pred_check
          %p303 = pneg %p109
        $region22: #{tpu_custom_call.1} parent=11 // pred_check_branch
          %305 = sbr.rel (%p303) target = $region24
        $region23: #{tpu_custom_call.1} parent=11 // pred_region
          _
        $region24: #{tpu_custom_call.1} parent=11 // pred_fallthru
          _
        // Predicated region
        $region25: #{tpu_custom_call.1} parent=11 // pred_check
          %p306 = pneg %p130
        $region26: #{tpu_custom_call.1} parent=11 // pred_check_branch
          %308 = sbr.rel (%p306) target = $region28
        $region27: #{tpu_custom_call.1} parent=11 // pred_region
          _
        $region28: #{tpu_custom_call.1} parent=11 // pred_fallthru
          _
        // Predicated region
        $region29: #{tpu_custom_call.1} parent=11 // pred_check
          %p309 = pneg %p151
        $region30: #{tpu_custom_call.1} parent=11 // pred_check_branch
          %311 = sbr.rel (%p309) target = $region32
        $region31: #{tpu_custom_call.1} parent=11 // pred_region
          _
        $region32: #{tpu_custom_call.1} parent=11 // pred_fallthru
          _
        // Predicated region
        $region33: #{tpu_custom_call.1} parent=11 // pred_check
          %p312 = pneg %p172
        $region34: #{tpu_custom_call.1} parent=11 // pred_check_branch
          %314 = sbr.rel (%p312) target = $region36
        $region35: #{tpu_custom_call.1} parent=11 // pred_region
          _
        $region36: #{tpu_custom_call.1} parent=11 // pred_fallthru
          _
        // Predicated region
        $region37: #{tpu_custom_call.1} parent=11 // pred_check
          %p315 = pneg %p193
        $region38: #{tpu_custom_call.1} parent=11 // pred_check_branch
          %317 = sbr.rel (%p315) target = $region40
        $region39: #{tpu_custom_call.1} parent=11 // pred_region
          _
        $region40: #{tpu_custom_call.1} parent=11 // pred_fallthru
          _
        // Predicated region
        $region41: #{tpu_custom_call.1} parent=11 // pred_check
          %p318 = pneg %p214
        $region42: #{tpu_custom_call.1} parent=11 // pred_check_branch
          %320 = sbr.rel (%p318) target = $region44
        $region43: #{tpu_custom_call.1} parent=11 // pred_region
          _
        $region44: #{tpu_custom_call.1} parent=11 // pred_fallthru
          _
        // Predicated region
        $region45: #{tpu_custom_call.1} parent=11 // pred_check
          %p321 = pneg %p235
        $region46: #{tpu_custom_call.1} parent=11 // pred_check_branch
          %323 = sbr.rel (%p321) target = $region48
        $region47: #{tpu_custom_call.1} parent=11 // pred_region
          _
        $region48: #{tpu_custom_call.1} parent=11 // pred_fallthru
          _
        // Predicated region
        $region49: #{tpu_custom_call.1} parent=11 // pred_check
          %p324 = pneg %p256
        $region50: #{tpu_custom_call.1} parent=11 // pred_check_branch
          %326 = sbr.rel (%p324) target = $region52
        $region51: #{tpu_custom_call.1} parent=11 // pred_region
          _
        $region52: #{tpu_custom_call.1} parent=11 // pred_fallthru
          _
      $region12: #{tpu_custom_call.1} parent=5 // pred_fallthru
        _
      %p327 = scmp.lt.s32.totalorder %s20, 2
      // Predicated region
      $region53: #{tpu_custom_call.1} parent=5 // pred_check
        %p328 = pneg %p327
      $region54: #{tpu_custom_call.1} parent=5 // pred_check_branch
        %330 = sbr.rel (%p328) target = $region56
      $region55: #{tpu_custom_call.1} parent=5 // pred_region
        // Predicated region
        $region57: #{tpu_custom_call.1} parent=55 // pred_check
          %p331 = pneg %p40
        $region58: #{tpu_custom_call.1} parent=55 // pred_check_branch
          %333 = sbr.rel (%p331) target = $region60
        $region59: #{tpu_custom_call.1} parent=55 // pred_region
          %s334 = smul.u32 16, %s20
          %p335 = scmp.lt.s32.totalorder %s334, 31
          %s336 = scalar_select %p335, %s334, 31
          %s337 = smul.addr %s336, 8
          %s338 = scalar_lea.vmem %s0, %s337
          %s339 = smul.u32 16, %s20
        $region60: #{tpu_custom_call.1} parent=55 // pred_fallthru
          _
      $region56: #{tpu_custom_call.1} parent=5 // pred_fallthru
        _
      %p340 = scmp.le.s32.totalorder 1, %s20
      %p341 = scmp.lt.s32.totalorder %s20, 3
      %p342 = pnand %p340, %p341
      %p343 = pneg %p342
      // Predicated region
      $region61: #{tpu_custom_call.1} parent=5 // pred_check
        _
      $region62: #{tpu_custom_call.1} parent=5 // pred_check_branch
        %345 = sbr.rel (%p342) target = $region64
      $region63: #{tpu_custom_call.1} parent=5 // pred_region
        %s346 = ssub.s32 %s20, 1
        %s347 = smul.u32 16, %s25
        %p348 = scmp.lt.s32.totalorder %s347, 31
        %s349 = scalar_select %p348, %s347, 31
        %s350 = smul.addr %s349, 8
        %s351 = scalar_lea.vmem %s0, %s350
        %p352 = pneg %p46
        %p353 = pneg %p43
        %p354 = pneg %p67
        %p355 = pneg %p64
        %p356 = pneg %p88
        %p357 = pneg %p85
        %p358 = pneg %p109
        %p359 = pneg %p106
        %p360 = pneg %p130
        %p361 = pneg %p127
        %p362 = pneg %p151
        %p363 = pneg %p148
        %p364 = pneg %p172
        %p365 = pneg %p169
        %p366 = pneg %p193
        %p367 = pneg %p190
        %p368 = pneg %p214
        %p369 = pneg %p211
        %p370 = pneg %p235
        %p371 = pneg %p232
        %p372 = pneg %p256
        %p373 = pneg %p253
        %p374 = pneg %p282
        %p375 = pneg %p279
        %s376 = sand.u32 %s269, 1
        %s377 = scalar_lea.sflag [#allocation3], %s376
        %s378 = sand.u32 %s269, 1
        %s379 = smul.addr %s378, 64
        %s380 = scalar_lea.vmem [#allocation2], %s379
        %s381 = smul.u32 16, %s25
        %p382 = scmp.lt.s32.totalorder %s381, 31
        %s383 = scalar_select %p382, %s381, 31
        %s384 = smul.addr %s383, 8
        %s385 = scalar_lea.vmem %s0, %s384
        %s386 = smul.u32 16, %s25
        %s387 = smul.u32 8, %s25
        %v388 = vld [vmem:[%s385] sm:$0xff]
        %v389 = vld [vmem:[%s385 + $0x8] sm:$0xff]
        %v390 = vld [vmem:[%s385 + $0x10] sm:$0xff]
        %v391 = vld [vmem:[%s385 + $0x18] sm:$0xff]
        %v392 = vld [vmem:[%s385 + $0x20] sm:$0xff]
        %v393 = vld [vmem:[%s385 + $0x28] sm:$0xff]
        %v394 = vld [vmem:[%s385 + $0x30] sm:$0xff]
        %v395 = vld [vmem:[%s385 + $0x38] sm:$0xff]
        %v396 = vld [vmem:[%s385 + $0x40] sm:$0xff]
        %v397 = vld [vmem:[%s385 + $0x48] sm:$0xff]
        %v398 = vld [vmem:[%s385 + $0x50] sm:$0xff]
        %v399 = vld [vmem:[%s385 + $0x58] sm:$0xff]
        %v400 = vld [vmem:[%s385 + $0x60] sm:$0xff]
        %v401 = vld [vmem:[%s385 + $0x68] sm:$0xff]
        %v402 = vld [vmem:[%s385 + $0x70] sm:$0xff]
        %v403 = vld [vmem:[%s385 + $0x78] sm:$0xff]
        %v404 = vld [vmem:[%s1] sm:$0xff]
        %v405 = vld [vmem:[%s1 + $0x8] sm:$0xff]
        %v406 = vld [vmem:[%s1 + $0x10] sm:$0xff]
        %v407 = vld [vmem:[%s1 + $0x18] sm:$0xff]
        %v408 = vld [vmem:[%s4] sm:$0x1]
        %v410 = vlaneseq
        %v411 = vshrl.u32 %v410, 7
        %v412 = vsub.s32 0, %v411
        %v413 = vrot.slane %v408, %v412
        %vm415 = vcmask 261120
        %v417 = vsel %vm415, %v388, 0
        %v420 = vsel %vm415, %v389, 0
        %v423 = vsel %vm415, %v390, 0
        %v426 = vsel %vm415, %v391, 0
        %v429 = vsel %vm415, %v392, 0
        %v432 = vsel %vm415, %v393, 0
        %v435 = vsel %vm415, %v394, 0
        %v438 = vsel %vm415, %v395, 0
        %v441 = vsel %vm415, %v396, 0
        %v444 = vsel %vm415, %v397, 0
        %v447 = vsel %vm415, %v398, 0
        %v450 = vsel %vm415, %v399, 0
        %v453 = vsel %vm415, %v400, 0
        %v456 = vsel %vm415, %v401, 0
        %v459 = vsel %vm415, %v402, 0
        %v462 = vsel %vm415, %v403, 0
        %464 = vmatprep.subr.mxu0 0.0
        %465 = vmatpush1.msra.mxu0 %v404
        %466 = vmatprep.subr.mxu0 0.0
        %467 = vmatpush1.msra.mxu0 %v405
        %468 = vmatprep.subr.mxu0 0.0
        %469 = vmatpush1.msra.mxu0 %v406
        %470 = vmatprep.subr.mxu0 0.0
        %471 = vmatpush1.msra.mxu0 %v407
        %472 = vmatprep.subr.mxu0 0.0
        %473 = vmatpush1.msra.mxu0 0.0
        %474 = vmatprep.subr.mxu0 0.0
        %475 = vmatpush1.msra.mxu0 0.0
        %476 = vmatprep.subr.mxu0 0.0
        %477 = vmatpush1.msra.mxu0 0.0
        %478 = vmatprep.subr.mxu0 0.0
        %479 = vmatpush1.msra.mxu0 0.0
        %480 = vmatprep.subr.mxu0 0.0
        %481 = vmatpush1.msra.mxu0 0.0
        %482 = vmatprep.subr.mxu0 0.0
        %483 = vmatpush1.msra.mxu0 0.0
        %484 = vmatprep.subr.mxu0 0.0
        %485 = vmatpush1.msra.mxu0 0.0
        %486 = vmatprep.subr.mxu0 0.0
        %487 = vmatpush1.msra.mxu0 0.0
        %488 = vmatprep.subr.mxu0 0.0
        %489 = vmatpush1.msra.mxu0 0.0
        %490 = vmatprep.subr.mxu0 0.0
        %491 = vmatpush1.msra.mxu0 0.0
        %492 = vmatprep.subr.mxu0 0.0
        %493 = vmatpush1.msra.mxu0 0.0
        %494 = vmatprep.subr.mxu0 0.0
        %495 = vmatpush1.msra.mxu0 0.0
        %496 = vmatprep.subr.mxu0 0.0
        %497 = vmatpush1.msra.mxu0 0.0
        %498 = vmatprep.subr.mxu0 0.0
        %499 = vmatpush1.msra.mxu0 0.0
        %500 = vmatprep.subr.mxu0 0.0
        %501 = vmatpush1.msra.mxu0 0.0
        %502 = vmatprep.subr.mxu0 0.0
        %503 = vmatpush1.msra.mxu0 0.0
        %504 = vmatprep.subr.mxu0 0.0
        %505 = vmatpush1.msra.mxu0 0.0
        %506 = vmatprep.subr.mxu0 0.0
        %507 = vmatpush1.msra.mxu0 0.0
        %508 = vmatprep.subr.mxu0 0.0
        %509 = vmatpush1.msra.mxu0 0.0
        %510 = vmatprep.subr.mxu0 0.0
        %511 = vmatpush1.msra.mxu0 0.0
        %512 = vmatprep.subr.mxu0 0.0
        %513 = vmatpush1.msra.mxu0 0.0
        %514 = vmatprep.subr.mxu0 0.0
        %515 = vmatpush1.msra.mxu0 0.0
        %516 = vmatprep.subr.mxu0 0.0
        %517 = vmatpush1.msra.mxu0 0.0
        %518 = vmatprep.subr.mxu0 0.0
        %519 = vmatpush1.msra.mxu0 0.0
        %520 = vmatprep.subr.mxu0 0.0
        %521 = vmatpush1.msra.mxu0 0.0
        %522 = vmatprep.subr.mxu0 0.0
        %523 = vmatpush1.msra.mxu0 0.0
        %524 = vmatprep.subr.mxu0 0.0
        %525 = vmatpush1.msra.mxu0 0.0
        %526 = vmatprep.subr.mxu0 0.0
        %527 = vmatpush1.msra.mxu0 0.0
        %528 = vmatprep.mubr.f32.mxu0 0.0
        %529 = vmatmul.mubr.f32.gmra.mrb[0].mxu0 %v417
        %v530 = vpop.f32.mrb[0].mxu0
        %v531 = vadd.f32 %v413, %v530
        %v532 = vpop.f32.mrb[0].mxu0
        %533 = vmatprep.mubr.f32.mxu0 0.0
        %534 = vmatmul.mubr.f32.gmra.mrb[0].mxu0 %v420
        %v535 = vpop.f32.mrb[0].mxu0
        %v536 = vadd.f32 %v413, %v535
        %v537 = vpop.f32.mrb[0].mxu0
        %538 = vmatprep.mubr.f32.mxu0 0.0
        %539 = vmatmul.mubr.f32.gmra.mrb[0].mxu0 %v423
        %v540 = vpop.f32.mrb[0].mxu0
        %v541 = vadd.f32 %v413, %v540
        %v542 = vpop.f32.mrb[0].mxu0
        %543 = vmatprep.mubr.f32.mxu0 0.0
        %544 = vmatmul.mubr.f32.gmra.mrb[0].mxu0 %v426
        %v545 = vpop.f32.mrb[0].mxu0
        %v546 = vadd.f32 %v413, %v545
        %v547 = vpop.f32.mrb[0].mxu0
        %548 = vmatprep.mubr.f32.mxu0 0.0
        %549 = vmatmul.mubr.f32.gmra.mrb[0].mxu0 %v429
        %v550 = vpop.f32.mrb[0].mxu0
        %v551 = vadd.f32 %v413, %v550
        %v552 = vpop.f32.mrb[0].mxu0
        %553 = vmatprep.mubr.f32.mxu0 0.0
        %554 = vmatmul.mubr.f32.gmra.mrb[0].mxu0 %v432
        %v555 = vpop.f32.mrb[0].mxu0
        %v556 = vadd.f32 %v413, %v555
        %v557 = vpop.f32.mrb[0].mxu0
        %558 = vmatprep.mubr.f32.mxu0 0.0
        %559 = vmatmul.mubr.f32.gmra.mrb[0].mxu0 %v435
        %v560 = vpop.f32.mrb[0].mxu0
        %v561 = vadd.f32 %v413, %v560
        %v562 = vpop.f32.mrb[0].mxu0
        %563 = vmatprep.mubr.f32.mxu0 0.0
        %564 = vmatmul.mubr.f32.gmra.mrb[0].mxu0 %v438
        %v565 = vpop.f32.mrb[0].mxu0
        %v566 = vadd.f32 %v413, %v565
        %v567 = vpop.f32.mrb[0].mxu0
        %568 = vmatprep.mubr.f32.mxu0 0.0
        %569 = vmatmul.mubr.f32.gmra.mrb[0].mxu0 %v441
        %v570 = vpop.f32.mrb[0].mxu0
        %v571 = vadd.f32 %v413, %v570
        %v572 = vpop.f32.mrb[0].mxu0
        %573 = vmatprep.mubr.f32.mxu0 0.0
        %574 = vmatmul.mubr.f32.gmra.mrb[0].mxu0 %v444
        %v575 = vpop.f32.mrb[0].mxu0
        %v576 = vadd.f32 %v413, %v575
        %v577 = vpop.f32.mrb[0].mxu0
        %578 = vmatprep.mubr.f32.mxu0 0.0
        %579 = vmatmul.mubr.f32.gmra.mrb[0].mxu0 %v447
        %v580 = vpop.f32.mrb[0].mxu0
        %v581 = vadd.f32 %v413, %v580
        %v582 = vpop.f32.mrb[0].mxu0
        %583 = vmatprep.mubr.f32.mxu0 0.0
        %584 = vmatmul.mubr.f32.gmra.mrb[0].mxu0 %v450
        %v585 = vpop.f32.mrb[0].mxu0
        %v586 = vadd.f32 %v413, %v585
        %v587 = vpop.f32.mrb[0].mxu0
        %588 = vmatprep.mubr.f32.mxu0 0.0
        %589 = vmatmul.mubr.f32.gmra.mrb[0].mxu0 %v453
        %v590 = vpop.f32.mrb[0].mxu0
        %v591 = vadd.f32 %v413, %v590
        %v592 = vpop.f32.mrb[0].mxu0
        %593 = vmatprep.mubr.f32.mxu0 0.0
        %594 = vmatmul.mubr.f32.gmra.mrb[0].mxu0 %v456
        %v595 = vpop.f32.mrb[0].mxu0
        %v596 = vadd.f32 %v413, %v595
        %v597 = vpop.f32.mrb[0].mxu0
        %598 = vmatprep.mubr.f32.mxu0 0.0
        %599 = vmatmul.mubr.f32.gmra.mrb[0].mxu0 %v459
        %v600 = vpop.f32.mrb[0].mxu0
        %v601 = vadd.f32 %v413, %v600
        %v602 = vpop.f32.mrb[0].mxu0
        %603 = vmatprep.mubr.f32.mxu0 0.0
        %604 = vmatmul.mubr.f32.gmra.mrb[0].mxu0 %v462
        %v605 = vpop.f32.mrb[0].mxu0
        %v606 = vadd.f32 %v413, %v605
        %v607 = vpop.f32.mrb[0].mxu0
        %608 = vdwg.mxu0
        %609 = vadd.xlane.f32.xlu0 %v531
        %v610 = vpop.xlane.xlu0 %609
        %611 = vadd.xlane.f32.xlu0 %v536
        %v612 = vpop.xlane.xlu0 %611
        %613 = vadd.xlane.f32.xlu0 %v541
        %v614 = vpop.xlane.xlu0 %613
        %615 = vadd.xlane.f32.xlu0 %v546
        %v616 = vpop.xlane.xlu0 %615
        %617 = vadd.xlane.f32.xlu0 %v551
        %v618 = vpop.xlane.xlu0 %617
        %619 = vadd.xlane.f32.xlu0 %v556
        %v620 = vpop.xlane.xlu0 %619
        %621 = vadd.xlane.f32.xlu0 %v561
        %v622 = vpop.xlane.xlu0 %621
        %623 = vadd.xlane.f32.xlu0 %v566
        %v624 = vpop.xlane.xlu0 %623
        %625 = vadd.xlane.f32.xlu0 %v571
        %v626 = vpop.xlane.xlu0 %625
        %627 = vadd.xlane.f32.xlu0 %v576
        %v628 = vpop.xlane.xlu0 %627
        %629 = vadd.xlane.f32.xlu0 %v581
        %v630 = vpop.xlane.xlu0 %629
        %631 = vadd.xlane.f32.xlu0 %v586
        %v632 = vpop.xlane.xlu0 %631
        %633 = vadd.xlane.f32.xlu0 %v591
        %v634 = vpop.xlane.xlu0 %633
        %635 = vadd.xlane.f32.xlu0 %v596
        %v636 = vpop.xlane.xlu0 %635
        %637 = vadd.xlane.f32.xlu0 %v601
        %v638 = vpop.xlane.xlu0 %637
        %639 = vadd.xlane.f32.xlu0 %v606
        %v640 = vpop.xlane.xlu0 %639
        %v641 = vmul.f32 %v531, %v531
        %v642 = vmul.f32 %v536, %v536
        %v643 = vmul.f32 %v541, %v541
        %v644 = vmul.f32 %v546, %v546
        %v645 = vmul.f32 %v551, %v551
        %v646 = vmul.f32 %v556, %v556
        %v647 = vmul.f32 %v561, %v561
        %v648 = vmul.f32 %v566, %v566
        %v649 = vmul.f32 %v571, %v571
        %v650 = vmul.f32 %v576, %v576
        %v651 = vmul.f32 %v581, %v581
        %v652 = vmul.f32 %v586, %v586
        %v653 = vmul.f32 %v591, %v591
        %v654 = vmul.f32 %v596, %v596
        %v655 = vmul.f32 %v601, %v601
        %v656 = vmul.f32 %v606, %v606
        %657 = vadd.xlane.f32.xlu0 %v641
        %v658 = vpop.xlane.xlu0 %657
        %659 = vadd.xlane.f32.xlu0 %v642
        %v660 = vpop.xlane.xlu0 %659
        %661 = vadd.xlane.f32.xlu0 %v643
        %v662 = vpop.xlane.xlu0 %661
        %663 = vadd.xlane.f32.xlu0 %v644
        %v664 = vpop.xlane.xlu0 %663
        %665 = vadd.xlane.f32.xlu0 %v645
        %v666 = vpop.xlane.xlu0 %665
        %667 = vadd.xlane.f32.xlu0 %v646
        %v668 = vpop.xlane.xlu0 %667
        %669 = vadd.xlane.f32.xlu0 %v647
        %v670 = vpop.xlane.xlu0 %669
        %671 = vadd.xlane.f32.xlu0 %v648
        %v672 = vpop.xlane.xlu0 %671
        %673 = vadd.xlane.f32.xlu0 %v649
        %v674 = vpop.xlane.xlu0 %673
        %675 = vadd.xlane.f32.xlu0 %v650
        %v676 = vpop.xlane.xlu0 %675
        %677 = vadd.xlane.f32.xlu0 %v651
        %v678 = vpop.xlane.xlu0 %677
        %679 = vadd.xlane.f32.xlu0 %v652
        %v680 = vpop.xlane.xlu0 %679
        %681 = vadd.xlane.f32.xlu0 %v653
        %v682 = vpop.xlane.xlu0 %681
        %683 = vadd.xlane.f32.xlu0 %v654
        %v684 = vpop.xlane.xlu0 %683
        %685 = vadd.xlane.f32.xlu0 %v655
        %v686 = vpop.xlane.xlu0 %685
        %687 = vadd.xlane.f32.xlu0 %v656
        %v688 = vpop.xlane.xlu0 %687
        %v689 = vmul.f32 %v610, 0.0078125
        %v690 = vmul.f32 %v612, 0.0078125
        %v691 = vmul.f32 %v614, 0.0078125
        %v692 = vmul.f32 %v616, 0.0078125
        %v693 = vmul.f32 %v618, 0.0078125
        %v694 = vmul.f32 %v620, 0.0078125
        %v695 = vmul.f32 %v622, 0.0078125
        %v696 = vmul.f32 %v624, 0.0078125
        %v697 = vmul.f32 %v626, 0.0078125
        %v698 = vmul.f32 %v628, 0.0078125
        %v699 = vmul.f32 %v630, 0.0078125
        %v700 = vmul.f32 %v632, 0.0078125
        %v701 = vmul.f32 %v634, 0.0078125
        %v702 = vmul.f32 %v636, 0.0078125
        %v703 = vmul.f32 %v638, 0.0078125
        %v704 = vmul.f32 %v640, 0.0078125
        %v705 = vmul.f32 %v658, 0.0078125
        %v706 = vmul.f32 %v660, 0.0078125
        %v707 = vmul.f32 %v662, 0.0078125
        %v708 = vmul.f32 %v664, 0.0078125
        %v709 = vmul.f32 %v666, 0.0078125
        %v710 = vmul.f32 %v668, 0.0078125
        %v711 = vmul.f32 %v670, 0.0078125
        %v712 = vmul.f32 %v672, 0.0078125
        %v713 = vmul.f32 %v674, 0.0078125
        %v714 = vmul.f32 %v676, 0.0078125
        %v715 = vmul.f32 %v678, 0.0078125
        %v716 = vmul.f32 %v680, 0.0078125
        %v717 = vmul.f32 %v682, 0.0078125
        %v718 = vmul.f32 %v684, 0.0078125
        %v719 = vmul.f32 %v686, 0.0078125
        %v720 = vmul.f32 %v688, 0.0078125
        %v721 = vmul.f32 %v689, %v689
        %v722 = vmul.f32 %v690, %v690
        %v723 = vmul.f32 %v691, %v691
        %v724 = vmul.f32 %v692, %v692
        %v725 = vmul.f32 %v693, %v693
        %v726 = vmul.f32 %v694, %v694
        %v727 = vmul.f32 %v695, %v695
        %v728 = vmul.f32 %v696, %v696
        %v729 = vmul.f32 %v697, %v697
        %v730 = vmul.f32 %v698, %v698
        %v731 = vmul.f32 %v699, %v699
        %v732 = vmul.f32 %v700, %v700
        %v733 = vmul.f32 %v701, %v701
        %v734 = vmul.f32 %v702, %v702
        %v735 = vmul.f32 %v703, %v703
        %v736 = vmul.f32 %v704, %v704
        %v737 = vsub.f32 %v705, %v721
        %v738 = vsub.f32 %v706, %v722
        %v739 = vsub.f32 %v707, %v723
        %v740 = vsub.f32 %v708, %v724
        %v741 = vsub.f32 %v709, %v725
        %v742 = vsub.f32 %v710, %v726
        %v743 = vsub.f32 %v711, %v727
        %v744 = vsub.f32 %v712, %v728
        %v745 = vsub.f32 %v713, %v729
        %v746 = vsub.f32 %v714, %v730
        %v747 = vsub.f32 %v715, %v731
        %v748 = vsub.f32 %v716, %v732
        %v749 = vsub.f32 %v717, %v733
        %v750 = vsub.f32 %v718, %v734
        %v751 = vsub.f32 %v719, %v735
        %v752 = vsub.f32 %v720, %v736
        %v753 = vsub.f32 %v531, %v689
        %v754 = vsub.f32 %v536, %v690
        %v755 = vsub.f32 %v541, %v691
        %v756 = vsub.f32 %v546, %v692
        %v757 = vsub.f32 %v551, %v693
        %v758 = vsub.f32 %v556, %v694
        %v759 = vsub.f32 %v561, %v695
        %v760 = vsub.f32 %v566, %v696
        %v761 = vsub.f32 %v571, %v697
        %v762 = vsub.f32 %v576, %v698
        %v763 = vsub.f32 %v581, %v699
        %v764 = vsub.f32 %v586, %v700
        %v765 = vsub.f32 %v591, %v701
        %v766 = vsub.f32 %v596, %v702
        %v767 = vsub.f32 %v601, %v703
        %v768 = vsub.f32 %v606, %v704
        %v769 = vadd.f32 %v737, 1e-05
        %v770 = vadd.f32 %v738, 1e-05
        %v771 = vadd.f32 %v739, 1e-05
        %v772 = vadd.f32 %v740, 1e-05
        %v773 = vadd.f32 %v741, 1e-05
        %v774 = vadd.f32 %v742, 1e-05
        %v775 = vadd.f32 %v743, 1e-05
        %v776 = vadd.f32 %v744, 1e-05
        %v777 = vadd.f32 %v745, 1e-05
        %v778 = vadd.f32 %v746, 1e-05
        %v779 = vadd.f32 %v747, 1e-05
        %v780 = vadd.f32 %v748, 1e-05
        %v781 = vadd.f32 %v749, 1e-05
        %v782 = vadd.f32 %v750, 1e-05
        %v783 = vadd.f32 %v751, 1e-05
        %v784 = vadd.f32 %v752, 1e-05
        %v785 = vrsqrt.pop %v769
        %v786 = vrsqrt.pop %v770
        %v787 = vrsqrt.pop %v771
        %v788 = vrsqrt.pop %v772
        %v789 = vrsqrt.pop %v773
        %v790 = vrsqrt.pop %v774
        %v791 = vrsqrt.pop %v775
        %v792 = vrsqrt.pop %v776
        %v793 = vrsqrt.pop %v777
        %v794 = vrsqrt.pop %v778
        %v795 = vrsqrt.pop %v779
        %v796 = vrsqrt.pop %v780
        %v797 = vrsqrt.pop %v781
        %v798 = vrsqrt.pop %v782
        %v799 = vrsqrt.pop %v783
        %v800 = vrsqrt.pop %v784
        %v801 = vmul.f32 %v753, %v785
        %v802 = vmul.f32 %v754, %v786
        %v803 = vmul.f32 %v755, %v787
        %v804 = vmul.f32 %v756, %v788
        %v805 = vmul.f32 %v757, %v789
        %v806 = vmul.f32 %v758, %v790
        %v807 = vmul.f32 %v759, %v791
        %v808 = vmul.f32 %v760, %v792
        %v809 = vmul.f32 %v761, %v793
        %v810 = vmul.f32 %v762, %v794
        %v811 = vmul.f32 %v763, %v795
        %v812 = vmul.f32 %v764, %v796
        %v813 = vmul.f32 %v765, %v797
        %v814 = vmul.f32 %v766, %v798
        %v815 = vmul.f32 %v767, %v799
        %v816 = vmul.f32 %v768, %v800
        %v817 = vld [vmem:[%s7] sm:$0x1]
        %v819 = vlaneseq
        %v820 = vshrl.u32 %v819, 7
        %v821 = vsub.s32 0, %v820
        %v822 = vrot.slane %v817, %v821
        %v824 = vmul.f32 %v801, %v822
        %v825 = vmul.f32 %v802, %v822
        %v826 = vmul.f32 %v803, %v822
        %v827 = vmul.f32 %v804, %v822
        %v828 = vmul.f32 %v805, %v822
        %v829 = vmul.f32 %v806, %v822
        %v830 = vmul.f32 %v807, %v822
        %v831 = vmul.f32 %v808, %v822
        %v832 = vmul.f32 %v809, %v822
        %v833 = vmul.f32 %v810, %v822
        %v834 = vmul.f32 %v811, %v822
        %v835 = vmul.f32 %v812, %v822
        %v836 = vmul.f32 %v813, %v822
        %v837 = vmul.f32 %v814, %v822
        %v838 = vmul.f32 %v815, %v822
        %v839 = vmul.f32 %v816, %v822
        %v840 = vld [vmem:[%s9] sm:$0x1]
        %v842 = vlaneseq
        %v843 = vshrl.u32 %v842, 7
        %v844 = vsub.s32 0, %v843
        %v845 = vrot.slane %v840, %v844
        %v847 = vadd.f32 %v824, %v845
        %v848 = vadd.f32 %v825, %v845
        %v849 = vadd.f32 %v826, %v845
        %v850 = vadd.f32 %v827, %v845
        %v851 = vadd.f32 %v828, %v845
        %v852 = vadd.f32 %v829, %v845
        %v853 = vadd.f32 %v830, %v845
        %v854 = vadd.f32 %v831, %v845
        %v855 = vadd.f32 %v832, %v845
        %v856 = vadd.f32 %v833, %v845
        %v857 = vadd.f32 %v834, %v845
        %v858 = vadd.f32 %v835, %v845
        %v859 = vadd.f32 %v836, %v845
        %v860 = vadd.f32 %v837, %v845
        %v861 = vadd.f32 %v838, %v845
        %v862 = vadd.f32 %v839, %v845
        %v863 = vxor.u32 %v847, 2147483648
        %v864 = vxor.u32 %v848, 2147483648
        %v865 = vxor.u32 %v849, 2147483648
        %v866 = vxor.u32 %v850, 2147483648
        %v867 = vxor.u32 %v851, 2147483648
        %v868 = vxor.u32 %v852, 2147483648
        %v869 = vxor.u32 %v853, 2147483648
        %v870 = vxor.u32 %v854, 2147483648
        %v871 = vxor.u32 %v855, 2147483648
        %v872 = vxor.u32 %v856, 2147483648
        %v873 = vxor.u32 %v857, 2147483648
        %v874 = vxor.u32 %v858, 2147483648
        %v875 = vxor.u32 %v859, 2147483648
        %v876 = vxor.u32 %v860, 2147483648
        %v877 = vxor.u32 %v861, 2147483648
        %v878 = vxor.u32 %v862, 2147483648
        %v879 = vmul.f32 %v863, 1.442695
        %v880 = vpow.pop %v879
        %v881 = vmul.f32 %v864, 1.442695
        %v882 = vpow.pop %v881
        %v883 = vmul.f32 %v865, 1.442695
        %v884 = vpow.pop %v883
        %v885 = vmul.f32 %v866, 1.442695
        %v886 = vpow.pop %v885
        %v887 = vmul.f32 %v867, 1.442695
        %v888 = vpow.pop %v887
        %v889 = vmul.f32 %v868, 1.442695
        %v890 = vpow.pop %v889
        %v891 = vmul.f32 %v869, 1.442695
        %v892 = vpow.pop %v891
        %v893 = vmul.f32 %v870, 1.442695
        %v894 = vpow.pop %v893
        %v895 = vmul.f32 %v871, 1.442695
        %v896 = vpow.pop %v895
        %v897 = vmul.f32 %v872, 1.442695
        %v898 = vpow.pop %v897
        %v899 = vmul.f32 %v873, 1.442695
        %v900 = vpow.pop %v899
        %v901 = vmul.f32 %v874, 1.442695
        %v902 = vpow.pop %v901
        %v903 = vmul.f32 %v875, 1.442695
        %v904 = vpow.pop %v903
        %v905 = vmul.f32 %v876, 1.442695
        %v906 = vpow.pop %v905
        %v907 = vmul.f32 %v877, 1.442695
        %v908 = vpow.pop %v907
        %v909 = vmul.f32 %v878, 1.442695
        %v910 = vpow.pop %v909
        %v911 = vadd.f32 %v880, 1.0
        %v912 = vadd.f32 %v882, 1.0
        %v913 = vadd.f32 %v884, 1.0
        %v914 = vadd.f32 %v886, 1.0
        %v915 = vadd.f32 %v888, 1.0
        %v916 = vadd.f32 %v890, 1.0
        %v917 = vadd.f32 %v892, 1.0
        %v918 = vadd.f32 %v894, 1.0
        %v919 = vadd.f32 %v896, 1.0
        %v920 = vadd.f32 %v898, 1.0
        %v921 = vadd.f32 %v900, 1.0
        %v922 = vadd.f32 %v902, 1.0
        %v923 = vadd.f32 %v904, 1.0
        %v924 = vadd.f32 %v906, 1.0
        %v925 = vadd.f32 %v908, 1.0
        %v926 = vadd.f32 %v910, 1.0
        %v927 = vrcp.pop %v911
        %v928 = vmul.f32 1.0, %v927
        %v929 = vrcp.pop %v912
        %v930 = vmul.f32 1.0, %v929
        %v931 = vrcp.pop %v913
        %v932 = vmul.f32 1.0, %v931
        %v933 = vrcp.pop %v914
        %v934 = vmul.f32 1.0, %v933
        %v935 = vrcp.pop %v915
        %v936 = vmul.f32 1.0, %v935
        %v937 = vrcp.pop %v916
        %v938 = vmul.f32 1.0, %v937
        %v939 = vrcp.pop %v917
        %v940 = vmul.f32 1.0, %v939
        %v941 = vrcp.pop %v918
        %v942 = vmul.f32 1.0, %v941
        %v943 = vrcp.pop %v919
        %v944 = vmul.f32 1.0, %v943
        %v945 = vrcp.pop %v920
        %v946 = vmul.f32 1.0, %v945
        %v947 = vrcp.pop %v921
        %v948 = vmul.f32 1.0, %v947
        %v949 = vrcp.pop %v922
        %v950 = vmul.f32 1.0, %v949
        %v951 = vrcp.pop %v923
        %v952 = vmul.f32 1.0, %v951
        %v953 = vrcp.pop %v924
        %v954 = vmul.f32 1.0, %v953
        %v955 = vrcp.pop %v925
        %v956 = vmul.f32 1.0, %v955
        %v957 = vrcp.pop %v926
        %v958 = vmul.f32 1.0, %v957
        %v959 = vmul.f32 %v847, %v928
        %v960 = vmul.f32 %v848, %v930
        %v961 = vmul.f32 %v849, %v932
        %v962 = vmul.f32 %v850, %v934
        %v963 = vmul.f32 %v851, %v936
        %v964 = vmul.f32 %v852, %v938
        %v965 = vmul.f32 %v853, %v940
        %v966 = vmul.f32 %v854, %v942
        %v967 = vmul.f32 %v855, %v944
        %v968 = vmul.f32 %v856, %v946
        %v969 = vmul.f32 %v857, %v948
        %v970 = vmul.f32 %v858, %v950
        %v971 = vmul.f32 %v859, %v952
        %v972 = vmul.f32 %v860, %v954
        %v973 = vmul.f32 %v861, %v956
        %v974 = vmul.f32 %v862, %v958
        %v975 = vld [vmem:[%s2] sm:$0xff]
        %v976 = vld [vmem:[%s2 + $0x8] sm:$0xff]
        %v977 = vld [vmem:[%s2 + $0x10] sm:$0xff]
        %v978 = vld [vmem:[%s2 + $0x18] sm:$0xff]
        %v979 = vld [vmem:[%s2 + $0x20] sm:$0xff]
        %v980 = vld [vmem:[%s2 + $0x28] sm:$0xff]
        %v981 = vld [vmem:[%s2 + $0x30] sm:$0xff]
        %v982 = vld [vmem:[%s2 + $0x38] sm:$0xff]
        %v983 = vld [vmem:[%s2 + $0x40] sm:$0xff]
        %v984 = vld [vmem:[%s2 + $0x48] sm:$0xff]
        %v985 = vld [vmem:[%s2 + $0x50] sm:$0xff]
        %v986 = vld [vmem:[%s2 + $0x58] sm:$0xff]
        %v987 = vld [vmem:[%s2 + $0x60] sm:$0xff]
        %v988 = vld [vmem:[%s2 + $0x68] sm:$0xff]
        %v989 = vld [vmem:[%s2 + $0x70] sm:$0xff]
        %v990 = vld [vmem:[%s2 + $0x78] sm:$0xff]
        %v991 = vld [vmem:[%s5] sm:$0x1]
        %v993 = vlaneseq
        %v994 = vshrl.u32 %v993, 7
        %v995 = vsub.s32 0, %v994
        %v996 = vrot.slane %v991, %v995
        %998 = vmatprep.subr.mxu0 0.0
        %999 = vmatpush1.msra.mxu0 %v975
        %1000 = vmatprep.subr.mxu0 0.0
        %1001 = vmatpush1.msra.mxu0 %v976
        %1002 = vmatprep.subr.mxu0 0.0
        %1003 = vmatpush1.msra.mxu0 %v977
        %1004 = vmatprep.subr.mxu0 0.0
        %1005 = vmatpush1.msra.mxu0 %v978
        %1006 = vmatprep.subr.mxu0 0.0
        %1007 = vmatpush1.msra.mxu0 %v979
        %1008 = vmatprep.subr.mxu0 0.0
        %1009 = vmatpush1.msra.mxu0 %v980
        %1010 = vmatprep.subr.mxu0 0.0
        %1011 = vmatpush1.msra.mxu0 %v981
        %1012 = vmatprep.subr.mxu0 0.0
        %1013 = vmatpush1.msra.mxu0 %v982
        %1014 = vmatprep.subr.mxu0 0.0
        %1015 = vmatpush1.msra.mxu0 %v983
        %1016 = vmatprep.subr.mxu0 0.0
        %1017 = vmatpush1.msra.mxu0 %v984
        %1018 = vmatprep.subr.mxu0 0.0
        %1019 = vmatpush1.msra.mxu0 %v985
        %1020 = vmatprep.subr.mxu0 0.0
        %1021 = vmatpush1.msra.mxu0 %v986
        %1022 = vmatprep.subr.mxu0 0.0
        %1023 = vmatpush1.msra.mxu0 %v987
        %1024 = vmatprep.subr.mxu0 0.0
        %1025 = vmatpush1.msra.mxu0 %v988
        %1026 = vmatprep.subr.mxu0 0.0
        %1027 = vmatpush1.msra.mxu0 %v989
        %1028 = vmatprep.subr.mxu0 0.0
        %1029 = vmatpush1.msra.mxu0 %v990
        %1030 = vmatprep.subr.mxu0 0.0
        %1031 = vmatpush1.msra.mxu0 0.0
        %1032 = vmatprep.subr.mxu0 0.0
        %1033 = vmatpush1.msra.mxu0 0.0
        %1034 = vmatprep.subr.mxu0 0.0
        %1035 = vmatpush1.msra.mxu0 0.0
        %1036 = vmatprep.subr.mxu0 0.0
        %1037 = vmatpush1.msra.mxu0 0.0
        %1038 = vmatprep.subr.mxu0 0.0
        %1039 = vmatpush1.msra.mxu0 0.0
        %1040 = vmatprep.subr.mxu0 0.0
        %1041 = vmatpush1.msra.mxu0 0.0
        %1042 = vmatprep.subr.mxu0 0.0
        %1043 = vmatpush1.msra.mxu0 0.0
        %1044 = vmatprep.subr.mxu0 0.0
        %1045 = vmatpush1.msra.mxu0 0.0
        %1046 = vmatprep.subr.mxu0 0.0
        %1047 = vmatpush1.msra.mxu0 0.0
        %1048 = vmatprep.subr.mxu0 0.0
        %1049 = vmatpush1.msra.mxu0 0.0
        %1050 = vmatprep.subr.mxu0 0.0
        %1051 = vmatpush1.msra.mxu0 0.0
        %1052 = vmatprep.subr.mxu0 0.0
        %1053 = vmatpush1.msra.mxu0 0.0
        %1054 = vmatprep.subr.mxu0 0.0
        %1055 = vmatpush1.msra.mxu0 0.0
        %1056 = vmatprep.subr.mxu0 0.0
        %1057 = vmatpush1.msra.mxu0 0.0
        %1058 = vmatprep.subr.mxu0 0.0
        %1059 = vmatpush1.msra.mxu0 0.0
        %1060 = vmatprep.subr.mxu0 0.0
        %1061 = vmatpush1.msra.mxu0 0.0
        %1062 = vmatprep.mubr.f32.mxu0 0.0
        %1063 = vmatmul.mubr.f32.gmra.mrb[0].mxu0 %v959
        %v1064 = vpop.f32.mrb[0].mxu0
        %v1065 = vadd.f32 %v996, %v1064
        %v1066 = vpop.f32.mrb[0].mxu0
        %1067 = vmatprep.mubr.f32.mxu0 0.0
        %1068 = vmatmul.mubr.f32.gmra.mrb[0].mxu0 %v960
        %v1069 = vpop.f32.mrb[0].mxu0
        %v1070 = vadd.f32 %v996, %v1069
        %v1071 = vpop.f32.mrb[0].mxu0
        %1072 = vmatprep.mubr.f32.mxu0 0.0
        %1073 = vmatmul.mubr.f32.gmra.mrb[0].mxu0 %v961
        %v1074 = vpop.f32.mrb[0].mxu0
        %v1075 = vadd.f32 %v996, %v1074
        %v1076 = vpop.f32.mrb[0].mxu0
        %1077 = vmatprep.mubr.f32.mxu0 0.0
        %1078 = vmatmul.mubr.f32.gmra.mrb[0].mxu0 %v962
        %v1079 = vpop.f32.mrb[0].mxu0
        %v1080 = vadd.f32 %v996, %v1079
        %v1081 = vpop.f32.mrb[0].mxu0
        %1082 = vmatprep.mubr.f32.mxu0 0.0
        %1083 = vmatmul.mubr.f32.gmra.mrb[0].mxu0 %v963
        %v1084 = vpop.f32.mrb[0].mxu0
        %v1085 = vadd.f32 %v996, %v1084
        %v1086 = vpop.f32.mrb[0].mxu0
        %1087 = vmatprep.mubr.f32.mxu0 0.0
        %1088 = vmatmul.mubr.f32.gmra.mrb[0].mxu0 %v964
        %v1089 = vpop.f32.mrb[0].mxu0
        %v1090 = vadd.f32 %v996, %v1089
        %v1091 = vpop.f32.mrb[0].mxu0
        %1092 = vmatprep.mubr.f32.mxu0 0.0
        %1093 = vmatmul.mubr.f32.gmra.mrb[0].mxu0 %v965
        %v1094 = vpop.f32.mrb[0].mxu0
        %v1095 = vadd.f32 %v996, %v1094
        %v1096 = vpop.f32.mrb[0].mxu0
        %1097 = vmatprep.mubr.f32.mxu0 0.0
        %1098 = vmatmul.mubr.f32.gmra.mrb[0].mxu0 %v966
        %v1099 = vpop.f32.mrb[0].mxu0
        %v1100 = vadd.f32 %v996, %v1099
        %v1101 = vpop.f32.mrb[0].mxu0
        %1102 = vmatprep.mubr.f32.mxu0 0.0
        %1103 = vmatmul.mubr.f32.gmra.mrb[0].mxu0 %v967
        %v1104 = vpop.f32.mrb[0].mxu0
        %v1105 = vadd.f32 %v996, %v1104
        %v1106 = vpop.f32.mrb[0].mxu0
        %1107 = vmatprep.mubr.f32.mxu0 0.0
        %1108 = vmatmul.mubr.f32.gmra.mrb[0].mxu0 %v968
        %v1109 = vpop.f32.mrb[0].mxu0
        %v1110 = vadd.f32 %v996, %v1109
        %v1111 = vpop.f32.mrb[0].mxu0
        %1112 = vmatprep.mubr.f32.mxu0 0.0
        %1113 = vmatmul.mubr.f32.gmra.mrb[0].mxu0 %v969
        %v1114 = vpop.f32.mrb[0].mxu0
        %v1115 = vadd.f32 %v996, %v1114
        %v1116 = vpop.f32.mrb[0].mxu0
        %1117 = vmatprep.mubr.f32.mxu0 0.0
        %1118 = vmatmul.mubr.f32.gmra.mrb[0].mxu0 %v970
        %v1119 = vpop.f32.mrb[0].mxu0
        %v1120 = vadd.f32 %v996, %v1119
        %v1121 = vpop.f32.mrb[0].mxu0
        %1122 = vmatprep.mubr.f32.mxu0 0.0
        %1123 = vmatmul.mubr.f32.gmra.mrb[0].mxu0 %v971
        %v1124 = vpop.f32.mrb[0].mxu0
        %v1125 = vadd.f32 %v996, %v1124
        %v1126 = vpop.f32.mrb[0].mxu0
        %1127 = vmatprep.mubr.f32.mxu0 0.0
        %1128 = vmatmul.mubr.f32.gmra.mrb[0].mxu0 %v972
        %v1129 = vpop.f32.mrb[0].mxu0
        %v1130 = vadd.f32 %v996, %v1129
        %v1131 = vpop.f32.mrb[0].mxu0
        %1132 = vmatprep.mubr.f32.mxu0 0.0
        %1133 = vmatmul.mubr.f32.gmra.mrb[0].mxu0 %v973
        %v1134 = vpop.f32.mrb[0].mxu0
        %v1135 = vadd.f32 %v996, %v1134
        %v1136 = vpop.f32.mrb[0].mxu0
        %1137 = vmatprep.mubr.f32.mxu0 0.0
        %1138 = vmatmul.mubr.f32.gmra.mrb[0].mxu0 %v974
        %v1139 = vpop.f32.mrb[0].mxu0
        %v1140 = vadd.f32 %v996, %v1139
        %v1141 = vpop.f32.mrb[0].mxu0
        %1142 = vdwg.mxu0
        %1143 = vadd.xlane.f32.xlu0 %v1065
        %v1144 = vpop.xlane.xlu0 %1143
        %1145 = vadd.xlane.f32.xlu0 %v1070
        %v1146 = vpop.xlane.xlu0 %1145
        %1147 = vadd.xlane.f32.xlu0 %v1075
        %v1148 = vpop.xlane.xlu0 %1147
        %1149 = vadd.xlane.f32.xlu0 %v1080
        %v1150 = vpop.xlane.xlu0 %1149
        %1151 = vadd.xlane.f32.xlu0 %v1085
        %v1152 = vpop.xlane.xlu0 %1151
        %1153 = vadd.xlane.f32.xlu0 %v1090
        %v1154 = vpop.xlane.xlu0 %1153
        %1155 = vadd.xlane.f32.xlu0 %v1095
        %v1156 = vpop.xlane.xlu0 %1155
        %1157 = vadd.xlane.f32.xlu0 %v1100
        %v1158 = vpop.xlane.xlu0 %1157
        %1159 = vadd.xlane.f32.xlu0 %v1105
        %v1160 = vpop.xlane.xlu0 %1159
        %1161 = vadd.xlane.f32.xlu0 %v1110
        %v1162 = vpop.xlane.xlu0 %1161
        %1163 = vadd.xlane.f32.xlu0 %v1115
        %v1164 = vpop.xlane.xlu0 %1163
        %1165 = vadd.xlane.f32.xlu0 %v1120
        %v1166 = vpop.xlane.xlu0 %1165
        %1167 = vadd.xlane.f32.xlu0 %v1125
        %v1168 = vpop.xlane.xlu0 %1167
        %1169 = vadd.xlane.f32.xlu0 %v1130
        %v1170 = vpop.xlane.xlu0 %1169
        %1171 = vadd.xlane.f32.xlu0 %v1135
        %v1172 = vpop.xlane.xlu0 %1171
        %1173 = vadd.xlane.f32.xlu0 %v1140
        %v1174 = vpop.xlane.xlu0 %1173
        %v1175 = vmul.f32 %v1065, %v1065
        %v1176 = vmul.f32 %v1070, %v1070
        %v1177 = vmul.f32 %v1075, %v1075
        %v1178 = vmul.f32 %v1080, %v1080
        %v1179 = vmul.f32 %v1085, %v1085
        %v1180 = vmul.f32 %v1090, %v1090
        %v1181 = vmul.f32 %v1095, %v1095
        %v1182 = vmul.f32 %v1100, %v1100
        %v1183 = vmul.f32 %v1105, %v1105
        %v1184 = vmul.f32 %v1110, %v1110
        %v1185 = vmul.f32 %v1115, %v1115
        %v1186 = vmul.f32 %v1120, %v1120
        %v1187 = vmul.f32 %v1125, %v1125
        %v1188 = vmul.f32 %v1130, %v1130
        %v1189 = vmul.f32 %v1135, %v1135
        %v1190 = vmul.f32 %v1140, %v1140
        %1191 = vadd.xlane.f32.xlu0 %v1175
        %v1192 = vpop.xlane.xlu0 %1191
        %1193 = vadd.xlane.f32.xlu0 %v1176
        %v1194 = vpop.xlane.xlu0 %1193
        %1195 = vadd.xlane.f32.xlu0 %v1177
        %v1196 = vpop.xlane.xlu0 %1195
        %1197 = vadd.xlane.f32.xlu0 %v1178
        %v1198 = vpop.xlane.xlu0 %1197
        %1199 = vadd.xlane.f32.xlu0 %v1179
        %v1200 = vpop.xlane.xlu0 %1199
        %1201 = vadd.xlane.f32.xlu0 %v1180
        %v1202 = vpop.xlane.xlu0 %1201
        %1203 = vadd.xlane.f32.xlu0 %v1181
        %v1204 = vpop.xlane.xlu0 %1203
        %1205 = vadd.xlane.f32.xlu0 %v1182
        %v1206 = vpop.xlane.xlu0 %1205
        %1207 = vadd.xlane.f32.xlu0 %v1183
        %v1208 = vpop.xlane.xlu0 %1207
        %1209 = vadd.xlane.f32.xlu0 %v1184
        %v1210 = vpop.xlane.xlu0 %1209
        %1211 = vadd.xlane.f32.xlu0 %v1185
        %v1212 = vpop.xlane.xlu0 %1211
        %1213 = vadd.xlane.f32.xlu0 %v1186
        %v1214 = vpop.xlane.xlu0 %1213
        %1215 = vadd.xlane.f32.xlu0 %v1187
        %v1216 = vpop.xlane.xlu0 %1215
        %1217 = vadd.xlane.f32.xlu0 %v1188
        %v1218 = vpop.xlane.xlu0 %1217
        %1219 = vadd.xlane.f32.xlu0 %v1189
        %v1220 = vpop.xlane.xlu0 %1219
        %1221 = vadd.xlane.f32.xlu0 %v1190
        %v1222 = vpop.xlane.xlu0 %1221
        %v1223 = vmul.f32 %v1144, 0.0078125
        %v1224 = vmul.f32 %v1146, 0.0078125
        %v1225 = vmul.f32 %v1148, 0.0078125
        %v1226 = vmul.f32 %v1150, 0.0078125
        %v1227 = vmul.f32 %v1152, 0.0078125
        %v1228 = vmul.f32 %v1154, 0.0078125
        %v1229 = vmul.f32 %v1156, 0.0078125
        %v1230 = vmul.f32 %v1158, 0.0078125
        %v1231 = vmul.f32 %v1160, 0.0078125
        %v1232 = vmul.f32 %v1162, 0.0078125
        %v1233 = vmul.f32 %v1164, 0.0078125
        %v1234 = vmul.f32 %v1166, 0.0078125
        %v1235 = vmul.f32 %v1168, 0.0078125
        %v1236 = vmul.f32 %v1170, 0.0078125
        %v1237 = vmul.f32 %v1172, 0.0078125
        %v1238 = vmul.f32 %v1174, 0.0078125
        %v1239 = vmul.f32 %v1192, 0.0078125
        %v1240 = vmul.f32 %v1194, 0.0078125
        %v1241 = vmul.f32 %v1196, 0.0078125
        %v1242 = vmul.f32 %v1198, 0.0078125
        %v1243 = vmul.f32 %v1200, 0.0078125
        %v1244 = vmul.f32 %v1202, 0.0078125
        %v1245 = vmul.f32 %v1204, 0.0078125
        %v1246 = vmul.f32 %v1206, 0.0078125
        %v1247 = vmul.f32 %v1208, 0.0078125
        %v1248 = vmul.f32 %v1210, 0.0078125
        %v1249 = vmul.f32 %v1212, 0.0078125
        %v1250 = vmul.f32 %v1214, 0.0078125
        %v1251 = vmul.f32 %v1216, 0.0078125
        %v1252 = vmul.f32 %v1218, 0.0078125
        %v1253 = vmul.f32 %v1220, 0.0078125
        %v1254 = vmul.f32 %v1222, 0.0078125
        %v1255 = vmul.f32 %v1223, %v1223
        %v1256 = vmul.f32 %v1224, %v1224
        %v1257 = vmul.f32 %v1225, %v1225
        %v1258 = vmul.f32 %v1226, %v1226
        %v1259 = vmul.f32 %v1227, %v1227
        %v1260 = vmul.f32 %v1228, %v1228
        %v1261 = vmul.f32 %v1229, %v1229
        %v1262 = vmul.f32 %v1230, %v1230
        %v1263 = vmul.f32 %v1231, %v1231
        %v1264 = vmul.f32 %v1232, %v1232
        %v1265 = vmul.f32 %v1233, %v1233
        %v1266 = vmul.f32 %v1234, %v1234
        %v1267 = vmul.f32 %v1235, %v1235
        %v1268 = vmul.f32 %v1236, %v1236
        %v1269 = vmul.f32 %v1237, %v1237
        %v1270 = vmul.f32 %v1238, %v1238
        %v1271 = vsub.f32 %v1239, %v1255
        %v1272 = vsub.f32 %v1240, %v1256
        %v1273 = vsub.f32 %v1241, %v1257
        %v1274 = vsub.f32 %v1242, %v1258
        %v1275 = vsub.f32 %v1243, %v1259
        %v1276 = vsub.f32 %v1244, %v1260
        %v1277 = vsub.f32 %v1245, %v1261
        %v1278 = vsub.f32 %v1246, %v1262
        %v1279 = vsub.f32 %v1247, %v1263
        %v1280 = vsub.f32 %v1248, %v1264
        %v1281 = vsub.f32 %v1249, %v1265
        %v1282 = vsub.f32 %v1250, %v1266
        %v1283 = vsub.f32 %v1251, %v1267
        %v1284 = vsub.f32 %v1252, %v1268
        %v1285 = vsub.f32 %v1253, %v1269
        %v1286 = vsub.f32 %v1254, %v1270
        %v1287 = vsub.f32 %v1065, %v1223
        %v1288 = vsub.f32 %v1070, %v1224
        %v1289 = vsub.f32 %v1075, %v1225
        %v1290 = vsub.f32 %v1080, %v1226
        %v1291 = vsub.f32 %v1085, %v1227
        %v1292 = vsub.f32 %v1090, %v1228
        %v1293 = vsub.f32 %v1095, %v1229
        %v1294 = vsub.f32 %v1100, %v1230
        %v1295 = vsub.f32 %v1105, %v1231
        %v1296 = vsub.f32 %v1110, %v1232
        %v1297 = vsub.f32 %v1115, %v1233
        %v1298 = vsub.f32 %v1120, %v1234
        %v1299 = vsub.f32 %v1125, %v1235
        %v1300 = vsub.f32 %v1130, %v1236
        %v1301 = vsub.f32 %v1135, %v1237
        %v1302 = vsub.f32 %v1140, %v1238
        %v1303 = vadd.f32 %v1271, 1e-05
        %v1304 = vadd.f32 %v1272, 1e-05
        %v1305 = vadd.f32 %v1273, 1e-05
        %v1306 = vadd.f32 %v1274, 1e-05
        %v1307 = vadd.f32 %v1275, 1e-05
        %v1308 = vadd.f32 %v1276, 1e-05
        %v1309 = vadd.f32 %v1277, 1e-05
        %v1310 = vadd.f32 %v1278, 1e-05
        %v1311 = vadd.f32 %v1279, 1e-05
        %v1312 = vadd.f32 %v1280, 1e-05
        %v1313 = vadd.f32 %v1281, 1e-05
        %v1314 = vadd.f32 %v1282, 1e-05
        %v1315 = vadd.f32 %v1283, 1e-05
        %v1316 = vadd.f32 %v1284, 1e-05
        %v1317 = vadd.f32 %v1285, 1e-05
        %v1318 = vadd.f32 %v1286, 1e-05
        %v1319 = vrsqrt.pop %v1303
        %v1320 = vrsqrt.pop %v1304
        %v1321 = vrsqrt.pop %v1305
        %v1322 = vrsqrt.pop %v1306
        %v1323 = vrsqrt.pop %v1307
        %v1324 = vrsqrt.pop %v1308
        %v1325 = vrsqrt.pop %v1309
        %v1326 = vrsqrt.pop %v1310
        %v1327 = vrsqrt.pop %v1311
        %v1328 = vrsqrt.pop %v1312
        %v1329 = vrsqrt.pop %v1313
        %v1330 = vrsqrt.pop %v1314
        %v1331 = vrsqrt.pop %v1315
        %v1332 = vrsqrt.pop %v1316
        %v1333 = vrsqrt.pop %v1317
        %v1334 = vrsqrt.pop %v1318
        %v1335 = vmul.f32 %v1287, %v1319
        %v1336 = vmul.f32 %v1288, %v1320
        %v1337 = vmul.f32 %v1289, %v1321
        %v1338 = vmul.f32 %v1290, %v1322
        %v1339 = vmul.f32 %v1291, %v1323
        %v1340 = vmul.f32 %v1292, %v1324
        %v1341 = vmul.f32 %v1293, %v1325
        %v1342 = vmul.f32 %v1294, %v1326
        %v1343 = vmul.f32 %v1295, %v1327
        %v1344 = vmul.f32 %v1296, %v1328
        %v1345 = vmul.f32 %v1297, %v1329
        %v1346 = vmul.f32 %v1298, %v1330
        %v1347 = vmul.f32 %v1299, %v1331
        %v1348 = vmul.f32 %v1300, %v1332
        %v1349 = vmul.f32 %v1301, %v1333
        %v1350 = vmul.f32 %v1302, %v1334
        %v1351 = vld [vmem:[%s8] sm:$0x1]
        %v1353 = vlaneseq
        %v1354 = vshrl.u32 %v1353, 7
        %v1355 = vsub.s32 0, %v1354
        %v1356 = vrot.slane %v1351, %v1355
        %v1358 = vmul.f32 %v1335, %v1356
        %v1359 = vmul.f32 %v1336, %v1356
        %v1360 = vmul.f32 %v1337, %v1356
        %v1361 = vmul.f32 %v1338, %v1356
        %v1362 = vmul.f32 %v1339, %v1356
        %v1363 = vmul.f32 %v1340, %v1356
        %v1364 = vmul.f32 %v1341, %v1356
        %v1365 = vmul.f32 %v1342, %v1356
        %v1366 = vmul.f32 %v1343, %v1356
        %v1367 = vmul.f32 %v1344, %v1356
        %v1368 = vmul.f32 %v1345, %v1356
        %v1369 = vmul.f32 %v1346, %v1356
        %v1370 = vmul.f32 %v1347, %v1356
        %v1371 = vmul.f32 %v1348, %v1356
        %v1372 = vmul.f32 %v1349, %v1356
        %v1373 = vmul.f32 %v1350, %v1356
        %v1374 = vld [vmem:[%s10] sm:$0x1]
        %v1376 = vlaneseq
        %v1377 = vshrl.u32 %v1376, 7
        %v1378 = vsub.s32 0, %v1377
        %v1379 = vrot.slane %v1374, %v1378
        %v1381 = vadd.f32 %v1358, %v1379
        %v1382 = vadd.f32 %v1359, %v1379
        %v1383 = vadd.f32 %v1360, %v1379
        %v1384 = vadd.f32 %v1361, %v1379
        %v1385 = vadd.f32 %v1362, %v1379
        %v1386 = vadd.f32 %v1363, %v1379
        %v1387 = vadd.f32 %v1364, %v1379
        %v1388 = vadd.f32 %v1365, %v1379
        %v1389 = vadd.f32 %v1366, %v1379
        %v1390 = vadd.f32 %v1367, %v1379
        %v1391 = vadd.f32 %v1368, %v1379
        %v1392 = vadd.f32 %v1369, %v1379
        %v1393 = vadd.f32 %v1370, %v1379
        %v1394 = vadd.f32 %v1371, %v1379
        %v1395 = vadd.f32 %v1372, %v1379
        %v1396 = vadd.f32 %v1373, %v1379
        %v1397 = vxor.u32 %v1381, 2147483648
        %v1398 = vxor.u32 %v1382, 2147483648
        %v1399 = vxor.u32 %v1383, 2147483648
        %v1400 = vxor.u32 %v1384, 2147483648
        %v1401 = vxor.u32 %v1385, 2147483648
        %v1402 = vxor.u32 %v1386, 2147483648
        %v1403 = vxor.u32 %v1387, 2147483648
        %v1404 = vxor.u32 %v1388, 2147483648
        %v1405 = vxor.u32 %v1389, 2147483648
        %v1406 = vxor.u32 %v1390, 2147483648
        %v1407 = vxor.u32 %v1391, 2147483648
        %v1408 = vxor.u32 %v1392, 2147483648
        %v1409 = vxor.u32 %v1393, 2147483648
        %v1410 = vxor.u32 %v1394, 2147483648
        %v1411 = vxor.u32 %v1395, 2147483648
        %v1412 = vxor.u32 %v1396, 2147483648
        %v1413 = vmul.f32 %v1397, 1.442695
        %v1414 = vpow.pop %v1413
        %v1415 = vmul.f32 %v1398, 1.442695
        %v1416 = vpow.pop %v1415
        %v1417 = vmul.f32 %v1399, 1.442695
        %v1418 = vpow.pop %v1417
        %v1419 = vmul.f32 %v1400, 1.442695
        %v1420 = vpow.pop %v1419
        %v1421 = vmul.f32 %v1401, 1.442695
        %v1422 = vpow.pop %v1421
        %v1423 = vmul.f32 %v1402, 1.442695
        %v1424 = vpow.pop %v1423
        %v1425 = vmul.f32 %v1403, 1.442695
        %v1426 = vpow.pop %v1425
        %v1427 = vmul.f32 %v1404, 1.442695
        %v1428 = vpow.pop %v1427
        %v1429 = vmul.f32 %v1405, 1.442695
        %v1430 = vpow.pop %v1429
        %v1431 = vmul.f32 %v1406, 1.442695
        %v1432 = vpow.pop %v1431
        %v1433 = vmul.f32 %v1407, 1.442695
        %v1434 = vpow.pop %v1433
        %v1435 = vmul.f32 %v1408, 1.442695
        %v1436 = vpow.pop %v1435
        %v1437 = vmul.f32 %v1409, 1.442695
        %v1438 = vpow.pop %v1437
        %v1439 = vmul.f32 %v1410, 1.442695
        %v1440 = vpow.pop %v1439
        %v1441 = vmul.f32 %v1411, 1.442695
        %v1442 = vpow.pop %v1441
        %v1443 = vmul.f32 %v1412, 1.442695
        %v1444 = vpow.pop %v1443
        %v1445 = vadd.f32 %v1414, 1.0
        %v1446 = vadd.f32 %v1416, 1.0
        %v1447 = vadd.f32 %v1418, 1.0
        %v1448 = vadd.f32 %v1420, 1.0
        %v1449 = vadd.f32 %v1422, 1.0
        %v1450 = vadd.f32 %v1424, 1.0
        %v1451 = vadd.f32 %v1426, 1.0
        %v1452 = vadd.f32 %v1428, 1.0
        %v1453 = vadd.f32 %v1430, 1.0
        %v1454 = vadd.f32 %v1432, 1.0
        %v1455 = vadd.f32 %v1434, 1.0
        %v1456 = vadd.f32 %v1436, 1.0
        %v1457 = vadd.f32 %v1438, 1.0
        %v1458 = vadd.f32 %v1440, 1.0
        %v1459 = vadd.f32 %v1442, 1.0
        %v1460 = vadd.f32 %v1444, 1.0
        %v1461 = vrcp.pop %v1445
        %v1462 = vmul.f32 1.0, %v1461
        %v1463 = vrcp.pop %v1446
        %v1464 = vmul.f32 1.0, %v1463
        %v1465 = vrcp.pop %v1447
        %v1466 = vmul.f32 1.0, %v1465
        %v1467 = vrcp.pop %v1448
        %v1468 = vmul.f32 1.0, %v1467
        %v1469 = vrcp.pop %v1449
        %v1470 = vmul.f32 1.0, %v1469
        %v1471 = vrcp.pop %v1450
        %v1472 = vmul.f32 1.0, %v1471
        %v1473 = vrcp.pop %v1451
        %v1474 = vmul.f32 1.0, %v1473
        %v1475 = vrcp.pop %v1452
        %v1476 = vmul.f32 1.0, %v1475
        %v1477 = vrcp.pop %v1453
        %v1478 = vmul.f32 1.0, %v1477
        %v1479 = vrcp.pop %v1454
        %v1480 = vmul.f32 1.0, %v1479
        %v1481 = vrcp.pop %v1455
        %v1482 = vmul.f32 1.0, %v1481
        %v1483 = vrcp.pop %v1456
        %v1484 = vmul.f32 1.0, %v1483
        %v1485 = vrcp.pop %v1457
        %v1486 = vmul.f32 1.0, %v1485
        %v1487 = vrcp.pop %v1458
        %v1488 = vmul.f32 1.0, %v1487
        %v1489 = vrcp.pop %v1459
        %v1490 = vmul.f32 1.0, %v1489
        %v1491 = vrcp.pop %v1460
        %v1492 = vmul.f32 1.0, %v1491
        %v1493 = vmul.f32 %v1381, %v1462
        %v1494 = vmul.f32 %v1382, %v1464
        %v1495 = vmul.f32 %v1383, %v1466
        %v1496 = vmul.f32 %v1384, %v1468
        %v1497 = vmul.f32 %v1385, %v1470
        %v1498 = vmul.f32 %v1386, %v1472
        %v1499 = vmul.f32 %v1387, %v1474
        %v1500 = vmul.f32 %v1388, %v1476
        %v1501 = vmul.f32 %v1389, %v1478
        %v1502 = vmul.f32 %v1390, %v1480
        %v1503 = vmul.f32 %v1391, %v1482
        %v1504 = vmul.f32 %v1392, %v1484
        %v1505 = vmul.f32 %v1393, %v1486
        %v1506 = vmul.f32 %v1394, %v1488
        %v1507 = vmul.f32 %v1395, %v1490
        %v1508 = vmul.f32 %v1396, %v1492
        %v1509 = vld [vmem:[%s3] sm:$0xff]
        %v1510 = vld [vmem:[%s3 + $0x8] sm:$0xff]
        %v1511 = vld [vmem:[%s3 + $0x10] sm:$0xff]
        %v1512 = vld [vmem:[%s3 + $0x18] sm:$0xff]
        %v1513 = vld [vmem:[%s3 + $0x20] sm:$0xff]
        %v1514 = vld [vmem:[%s3 + $0x28] sm:$0xff]
        %v1515 = vld [vmem:[%s3 + $0x30] sm:$0xff]
        %v1516 = vld [vmem:[%s3 + $0x38] sm:$0xff]
        %v1517 = vld [vmem:[%s3 + $0x40] sm:$0xff]
        %v1518 = vld [vmem:[%s3 + $0x48] sm:$0xff]
        %v1519 = vld [vmem:[%s3 + $0x50] sm:$0xff]
        %v1520 = vld [vmem:[%s3 + $0x58] sm:$0xff]
        %v1521 = vld [vmem:[%s3 + $0x60] sm:$0xff]
        %v1522 = vld [vmem:[%s3 + $0x68] sm:$0xff]
        %v1523 = vld [vmem:[%s3 + $0x70] sm:$0xff]
        %v1524 = vld [vmem:[%s3 + $0x78] sm:$0xff]
        %v1525 = vld [vmem:[%s6] sm:$0x1]
        %v1527 = vlaneseq
        %v1528 = vshrl.u32 %v1527, 7
        %v1529 = vsub.s32 0, %v1528
        %v1530 = vrot.slane %v1525, %v1529
        %1532 = vmatprep.subr.mxu0 0.0
        %1533 = vmatpush1.msra.mxu0 %v1509
        %1534 = vmatprep.subr.mxu0 0.0
        %1535 = vmatpush1.msra.mxu0 %v1510
        %1536 = vmatprep.subr.mxu0 0.0
        %1537 = vmatpush1.msra.mxu0 %v1511
        %1538 = vmatprep.subr.mxu0 0.0
        %1539 = vmatpush1.msra.mxu0 %v1512
        %1540 = vmatprep.subr.mxu0 0.0
        %1541 = vmatpush1.msra.mxu0 %v1513
        %1542 = vmatprep.subr.mxu0 0.0
        %1543 = vmatpush1.msra.mxu0 %v1514
        %1544 = vmatprep.subr.mxu0 0.0
        %1545 = vmatpush1.msra.mxu0 %v1515
        %1546 = vmatprep.subr.mxu0 0.0
        %1547 = vmatpush1.msra.mxu0 %v1516
        %1548 = vmatprep.subr.mxu0 0.0
        %1549 = vmatpush1.msra.mxu0 %v1517
        %1550 = vmatprep.subr.mxu0 0.0
        %1551 = vmatpush1.msra.mxu0 %v1518
        %1552 = vmatprep.subr.mxu0 0.0
        %1553 = vmatpush1.msra.mxu0 %v1519
        %1554 = vmatprep.subr.mxu0 0.0
        %1555 = vmatpush1.msra.mxu0 %v1520
        %1556 = vmatprep.subr.mxu0 0.0
        %1557 = vmatpush1.msra.mxu0 %v1521
        %1558 = vmatprep.subr.mxu0 0.0
        %1559 = vmatpush1.msra.mxu0 %v1522
        %1560 = vmatprep.subr.mxu0 0.0
        %1561 = vmatpush1.msra.mxu0 %v1523
        %1562 = vmatprep.subr.mxu0 0.0
        %1563 = vmatpush1.msra.mxu0 %v1524
        %1564 = vmatprep.subr.mxu0 0.0
        %1565 = vmatpush1.msra.mxu0 0.0
        %1566 = vmatprep.subr.mxu0 0.0
        %1567 = vmatpush1.msra.mxu0 0.0
        %1568 = vmatprep.subr.mxu0 0.0
        %1569 = vmatpush1.msra.mxu0 0.0
        %1570 = vmatprep.subr.mxu0 0.0
        %1571 = vmatpush1.msra.mxu0 0.0
        %1572 = vmatprep.subr.mxu0 0.0
        %1573 = vmatpush1.msra.mxu0 0.0
        %1574 = vmatprep.subr.mxu0 0.0
        %1575 = vmatpush1.msra.mxu0 0.0
        %1576 = vmatprep.subr.mxu0 0.0
        %1577 = vmatpush1.msra.mxu0 0.0
        %1578 = vmatprep.subr.mxu0 0.0
        %1579 = vmatpush1.msra.mxu0 0.0
        %1580 = vmatprep.subr.mxu0 0.0
        %1581 = vmatpush1.msra.mxu0 0.0
        %1582 = vmatprep.subr.mxu0 0.0
        %1583 = vmatpush1.msra.mxu0 0.0
        %1584 = vmatprep.subr.mxu0 0.0
        %1585 = vmatpush1.msra.mxu0 0.0
        %1586 = vmatprep.subr.mxu0 0.0
        %1587 = vmatpush1.msra.mxu0 0.0
        %1588 = vmatprep.subr.mxu0 0.0
        %1589 = vmatpush1.msra.mxu0 0.0
        %1590 = vmatprep.subr.mxu0 0.0
        %1591 = vmatpush1.msra.mxu0 0.0
        %1592 = vmatprep.subr.mxu0 0.0
        %1593 = vmatpush1.msra.mxu0 0.0
        %1594 = vmatprep.subr.mxu0 0.0
        %1595 = vmatpush1.msra.mxu0 0.0
        %1596 = vmatprep.mubr.f32.mxu0 0.0
        %1597 = vmatmul.mubr.f32.gmra.mrb[0].mxu0 %v1493
        %v1598 = vpop.f32.mrb[0].mxu0
        %v1599 = vadd.f32 %v1530, %v1598
        %v1600 = vpop.f32.mrb[0].mxu0
        %1601 = vmatprep.mubr.f32.mxu0 0.0
        %1602 = vmatmul.mubr.f32.gmra.mrb[0].mxu0 %v1494
        %v1603 = vpop.f32.mrb[0].mxu0
        %v1604 = vadd.f32 %v1530, %v1603
        %v1605 = vpop.f32.mrb[0].mxu0
        %1606 = vmatprep.mubr.f32.mxu0 0.0
        %1607 = vmatmul.mubr.f32.gmra.mrb[0].mxu0 %v1495
        %v1608 = vpop.f32.mrb[0].mxu0
        %v1609 = vadd.f32 %v1530, %v1608
        %v1610 = vpop.f32.mrb[0].mxu0
        %1611 = vmatprep.mubr.f32.mxu0 0.0
        %1612 = vmatmul.mubr.f32.gmra.mrb[0].mxu0 %v1496
        %v1613 = vpop.f32.mrb[0].mxu0
        %v1614 = vadd.f32 %v1530, %v1613
        %v1615 = vpop.f32.mrb[0].mxu0
        %1616 = vmatprep.mubr.f32.mxu0 0.0
        %1617 = vmatmul.mubr.f32.gmra.mrb[0].mxu0 %v1497
        %v1618 = vpop.f32.mrb[0].mxu0
        %v1619 = vadd.f32 %v1530, %v1618
        %v1620 = vpop.f32.mrb[0].mxu0
        %1621 = vmatprep.mubr.f32.mxu0 0.0
        %1622 = vmatmul.mubr.f32.gmra.mrb[0].mxu0 %v1498
        %v1623 = vpop.f32.mrb[0].mxu0
        %v1624 = vadd.f32 %v1530, %v1623
        %v1625 = vpop.f32.mrb[0].mxu0
        %1626 = vmatprep.mubr.f32.mxu0 0.0
        %1627 = vmatmul.mubr.f32.gmra.mrb[0].mxu0 %v1499
        %v1628 = vpop.f32.mrb[0].mxu0
        %v1629 = vadd.f32 %v1530, %v1628
        %v1630 = vpop.f32.mrb[0].mxu0
        %1631 = vmatprep.mubr.f32.mxu0 0.0
        %1632 = vmatmul.mubr.f32.gmra.mrb[0].mxu0 %v1500
        %v1633 = vpop.f32.mrb[0].mxu0
        %v1634 = vadd.f32 %v1530, %v1633
        %v1635 = vpop.f32.mrb[0].mxu0
        %1636 = vmatprep.mubr.f32.mxu0 0.0
        %1637 = vmatmul.mubr.f32.gmra.mrb[0].mxu0 %v1501
        %v1638 = vpop.f32.mrb[0].mxu0
        %v1639 = vadd.f32 %v1530, %v1638
        %v1640 = vpop.f32.mrb[0].mxu0
        %1641 = vmatprep.mubr.f32.mxu0 0.0
        %1642 = vmatmul.mubr.f32.gmra.mrb[0].mxu0 %v1502
        %v1643 = vpop.f32.mrb[0].mxu0
        %v1644 = vadd.f32 %v1530, %v1643
        %v1645 = vpop.f32.mrb[0].mxu0
        %1646 = vmatprep.mubr.f32.mxu0 0.0
        %1647 = vmatmul.mubr.f32.gmra.mrb[0].mxu0 %v1503
        %v1648 = vpop.f32.mrb[0].mxu0
        %v1649 = vadd.f32 %v1530, %v1648
        %v1650 = vpop.f32.mrb[0].mxu0
        %1651 = vmatprep.mubr.f32.mxu0 0.0
        %1652 = vmatmul.mubr.f32.gmra.mrb[0].mxu0 %v1504
        %v1653 = vpop.f32.mrb[0].mxu0
        %v1654 = vadd.f32 %v1530, %v1653
        %v1655 = vpop.f32.mrb[0].mxu0
        %1656 = vmatprep.mubr.f32.mxu0 0.0
        %1657 = vmatmul.mubr.f32.gmra.mrb[0].mxu0 %v1505
        %v1658 = vpop.f32.mrb[0].mxu0
        %v1659 = vadd.f32 %v1530, %v1658
        %v1660 = vpop.f32.mrb[0].mxu0
        %1661 = vmatprep.mubr.f32.mxu0 0.0
        %1662 = vmatmul.mubr.f32.gmra.mrb[0].mxu0 %v1506
        %v1663 = vpop.f32.mrb[0].mxu0
        %v1664 = vadd.f32 %v1530, %v1663
        %v1665 = vpop.f32.mrb[0].mxu0
        %1666 = vmatprep.mubr.f32.mxu0 0.0
        %1667 = vmatmul.mubr.f32.gmra.mrb[0].mxu0 %v1507
        %v1668 = vpop.f32.mrb[0].mxu0
        %v1669 = vadd.f32 %v1530, %v1668
        %v1670 = vpop.f32.mrb[0].mxu0
        %1671 = vmatprep.mubr.f32.mxu0 0.0
        %1672 = vmatmul.mubr.f32.gmra.mrb[0].mxu0 %v1508
        %v1673 = vpop.f32.mrb[0].mxu0
        %v1674 = vadd.f32 %v1530, %v1673
        %v1675 = vpop.f32.mrb[0].mxu0
        %1676 = vdwg.mxu0
        %1685 = vrot.lane.b32.xlu0 %v1639, 64
        %v1686 = vpop.permute.xlu0 %1685
        %1687 = vrot.lane.b32.xlu0 %v1644, 64
        %v1688 = vpop.permute.xlu0 %1687
        %1689 = vrot.lane.b32.xlu0 %v1649, 64
        %v1690 = vpop.permute.xlu0 %1689
        %1691 = vrot.lane.b32.xlu0 %v1654, 64
        %v1692 = vpop.permute.xlu0 %1691
        %1693 = vrot.lane.b32.xlu0 %v1659, 64
        %v1694 = vpop.permute.xlu0 %1693
        %1695 = vrot.lane.b32.xlu0 %v1664, 64
        %v1696 = vpop.permute.xlu0 %1695
        %1697 = vrot.lane.b32.xlu0 %v1669, 64
        %v1698 = vpop.permute.xlu0 %1697
        %1699 = vrot.lane.b32.xlu0 %v1674, 64
        %v1700 = vpop.permute.xlu0 %1699
        %vm1709 = vcmask 523264
        %v1710 = vsel %vm1709, %v1599, %v1686
        %v1711 = vsel %vm1709, %v1604, %v1688
        %v1712 = vsel %vm1709, %v1609, %v1690
        %v1713 = vsel %vm1709, %v1614, %v1692
        %v1714 = vsel %vm1709, %v1619, %v1694
        %v1715 = vsel %vm1709, %v1624, %v1696
        %v1716 = vsel %vm1709, %v1629, %v1698
        %v1717 = vsel %vm1709, %v1634, %v1700
        %1718 = vst [vmem:[%s380] sm:$0xff] %v1710
        %1719 = vst [vmem:[%s380 + $0x8] sm:$0xff] %v1711
        %1720 = vst [vmem:[%s380 + $0x10] sm:$0xff] %v1712
        %1721 = vst [vmem:[%s380 + $0x18] sm:$0xff] %v1713
        %1722 = vst [vmem:[%s380 + $0x20] sm:$0xff] %v1714
        %1723 = vst [vmem:[%s380 + $0x28] sm:$0xff] %v1715
        %1724 = vst [vmem:[%s380 + $0x30] sm:$0xff] %v1716
        %1725 = vst [vmem:[%s380 + $0x38] sm:$0xff] %v1717
        %s1726 = sand.u32 %s269, 1
        %s1727 = scalar_lea.sflag [#allocation3], %s1726
        %s1728 = sand.u32 %s269, 1
        %s1729 = smul.addr %s1728, 64
        %s1730 = scalar_lea.vmem [#allocation2], %s1729
        // Predicated region
        $region65: #{tpu_custom_call.1} parent=63 // pred_check
          %p1731 = pneg %p279
        $region66: #{tpu_custom_call.1} parent=63 // pred_check_branch
          %1733 = sbr.rel (%p1731) target = $region68
        $region67: #{tpu_custom_call.1} parent=63 // pred_region
          %s1734 = smul.u32 8, %s25
          %s1736 = ssub.s32 1024, 1024
          %1737 = vsyncadd %s1727, %s1736
          %s1738 = smul.addr %s1734, 128
          %s1739 = scalar_lea.hbm %s11, %s1738
          %s1740 = sshll.u32 %s1730, 4
          %s1741 = int_to_ptr.vmem [resolvable:$true] %s1740
          %1746 = dma.vmem_to_hbm [thread:$0]  %s1741, 1024, %s1739, %s1727, 128, 128, 8
        $region68: #{tpu_custom_call.1} parent=63 // pred_fallthru
          _
      $region64: #{tpu_custom_call.1} parent=5 // pred_fallthru
        _
      %p1747 = scmp.le.s32.totalorder 2, %s20
      // Predicated region
      $region69: #{tpu_custom_call.1} parent=5 // pred_check
        %p1748 = pneg %p1747
      $region70: #{tpu_custom_call.1} parent=5 // pred_check_branch
        %1750 = sbr.rel (%p1748) target = $region72
      $region71: #{tpu_custom_call.1} parent=5 // pred_region
        %s1751 = ssub.s32 %s20, 2
        // Predicated region
        $region73: #{tpu_custom_call.1} parent=71 // pred_check
          %p1752 = pneg %p285
        $region74: #{tpu_custom_call.1} parent=71 // pred_check_branch
          %1754 = sbr.rel (%p1752) target = $region76
        $region75: #{tpu_custom_call.1} parent=71 // pred_region
          %s1755 = sand.u32 %s270, 1
          %s1756 = scalar_lea.sflag [#allocation3], %s1755
          %s1757 = sand.u32 %s270, 1
          %s1758 = smul.addr %s1757, 64
          %s1759 = scalar_lea.vmem [#allocation2], %s1758
          %1760 = dma.done %s1756, 1024
        $region76: #{tpu_custom_call.1} parent=71 // pred_fallthru
          _
      $region72: #{tpu_custom_call.1} parent=5 // pred_fallthru
        _
    $region6: #{tpu_custom_call.1} parent=1 // loop_footer
      %s24 = sadd.s32 1, %s20
    $region7: #{tpu_custom_call.1} parent=1 // loop_footer_branch
      %19 = sbr.rel target = $region3
    $region8: #{tpu_custom_call.1} parent=1 // loop_exit
      _
    %1761 = vsyncpa [#allocation3], 1
    %s1762 = scalar_lea.sflag [#allocation3], 1
    %1763 = vsyncpa %s1762, 1

</llo_original>
